<compile_context>
chip_gen: v6e
topology: v6e:2x2x1
jax: 0.10.0
libtpu: 0.0.40
codegen_flags: <defaults>
</compile_context>

<pallas_src>
import jax
import jax.numpy as jnp
from jax.experimental import pallas as pl
from jax.experimental.pallas import tpu as pltpu

# scaled-down model sizes (resnet50's num_ftrs=2048 -> 16 here)
NUM_FTRS = 16
POOL_W = 15                    # adaptive pool width -> flattened features = NUM_FTRS * 15
FC_IN = NUM_FTRS * POOL_W      # 240
FC_OUT = NUM_FTRS * 10         # 160
FC_OUT_PAD = 256               # lane-dense padded FC output (sliced back to 160 in the wrapper)
KEXP = NUM_FTRS * POOL_W       # 240: conv output expanded over (channel, pool-bin) pairs
KPAD = 32                      # im2col contraction 9*Cin=27 padded to 32
BN_EPS = 1e-5


# ---------------------------------------------------------------------------
# Fused kernel: one grid step == one batch tile (TB images)
#   conv3x3(pad=1) [1 matmul] + bias + ReLU + bin mask
#   -> adaptive avg-pool + channel-major flatten [1 matmul]
#   -> Linear [1 matmul] + bias + ReLU + Dropout(eval)=id + folded BatchNorm1d
# ---------------------------------------------------------------------------
def _fused_forward_kernel(xc_ref, wconv_ref, bconv_ref, mask_ref, pool_ref,
                          wfc_ref, bfc_ref, scale_ref, shift_ref, o_ref):
    # conv3x3 (taps collapsed into K, output expanded over pool bins): one bf16 matmul, f32 acc
    y = jnp.dot(xc_ref[...], wconv_ref[...],
                preferred_element_type=jnp.float32)            # (TB*HW, 240) f32
    # bias + ReLU in f32 (VPU), then zero out the columns whose bin != this pixel's W-bin
    y = jnp.maximum(y + bconv_ref[...], 0.0) * mask_ref[...]
    # adaptive avg-pool over (H, in-bin W) + per-image flatten: one small matmul
    fc_in = jnp.dot(pool_ref[...], y,
                    preferred_element_type=jnp.float32)        # (TB, 240) f32
    # fc (single matmul, K=240, N=256 lane-dense) -> ReLU -> Dropout(eval)=id -> folded BN
    z = jnp.dot(fc_in, wfc_ref[...].astype(jnp.float32),
                preferred_element_type=jnp.float32) + bfc_ref[...]
    z = jnp.maximum(z, 0.0)
    o_ref[...] = (z * scale_ref[...] + shift_ref[...]).astype(o_ref.dtype)


# ---------------------------------------------------------------------------
# Parameter preparation (folds BN, pooling, flatten, bin selection, lane padding)
# ---------------------------------------------------------------------------
def _prepare(params, H, W, tb):
    cin = params["conv_w"].shape[1]
    hw = H * W
    wdiv = W // POOL_W

    # im2col conv weight, expanded over pool bins: column index k = c*POOL_W + p
    conv_w = params["conv_w"].astype(jnp.float32)                       # (Cout, Cin, 3, 3) OIHW
    w_taps = jnp.transpose(conv_w, (2, 3, 1, 0)).reshape(9 * cin, NUM_FTRS)  # row = tap*Cin + ci
    w_exp = jnp.repeat(w_taps, POOL_W, axis=1)                          # (27, 240)
    w_conv = jnp.zeros((KPAD, KEXP), jnp.float32).at[:9 * cin, :].set(w_exp)
    w_conv = w_conv.astype(jnp.bfloat16)                                # bf16 MXU operand
    b_conv = jnp.repeat(params["conv_b"].astype(jnp.float32), POOL_W)[None, :]   # (1, 240)

    # bin-selection mask: mask[(b*H+h)*W + w, c*15 + p] = (w // wdiv == p)
    m_wp = (jnp.arange(W)[:, None] // wdiv ==
            jnp.arange(POOL_W)[None, :]).astype(jnp.float32)            # (W, 15)
    mask = jnp.tile(jnp.tile(m_wp, (1, NUM_FTRS)), (tb * H, 1))         # (TB*HW, 240)

    # per-image averaging matrix (mean over H and the in-bin W positions), block over the tile
    pool = jnp.repeat(jnp.eye(tb, dtype=jnp.float32) / (H * wdiv), hw, axis=1)  # (TB, TB*HW)

    # fc weight: rows already in PyTorch's channel-major flatten order k = c*15 + p;
    # K = 240 (no zero-padded channels), N padded 160 -> 256 for lane-dense output
    fc_w = params["fc_w"].astype(jnp.float32)                           # (160, 240)
    w_fc = jnp.zeros((FC_IN, FC_OUT_PAD), jnp.float32).at[:, :FC_OUT].set(fc_w.T)
    w_fc = w_fc.astype(jnp.bfloat16)
    b_fc = jnp.zeros((1, FC_OUT_PAD), jnp.float32).at[0, :FC_OUT].set(
        params["fc_b"].astype(jnp.float32))

    scale_v = (params["bn_gamma"] * jax.lax.rsqrt(params["bn_var"] + BN_EPS)).astype(jnp.float32)
    shift_v = (params["bn_beta"] - params["bn_mean"] * scale_v).astype(jnp.float32)
    scale = jnp.zeros((1, FC_OUT_PAD), jnp.float32).at[0, :FC_OUT].set(scale_v)
    shift = jnp.zeros((1, FC_OUT_PAD), jnp.float32).at[0, :FC_OUT].set(shift_v)
    return w_conv, b_conv, mask, pool, w_fc, b_fc, scale, shift


def _im2col(x_nchw):
    """(B, Cin, H, W) -> (B*H*W, KPAD) bf16, column = tap*Cin + ci (tap = kh*3 + kw)."""
    B, cin, H, W = x_nchw.shape
    xp = jnp.pad(x_nchw.astype(jnp.float32), ((0, 0), (0, 0), (1, 1), (1, 1)))
    taps = [xp[:, :, kh:kh + H, kw:kw + W] for kh in range(3) for kw in range(3)]
    xc = jnp.stack(taps, axis=1)                       # (B, 9, Cin, H, W)
    xc = jnp.transpose(xc, (0, 3, 4, 1, 2))            # (B, H, W, 9, Cin)
    xc = xc.reshape(B * H * W, 9 * cin)
    xc = jnp.pad(xc, ((0, 0), (0, KPAD - 9 * cin)))
    return xc.astype(jnp.bfloat16)


# ---------------------------------------------------------------------------
# Full forward: one fused pallas_call, batch-tiled grid
# ---------------------------------------------------------------------------
def forward(x_nchw, params, *, batch_tile=None):
    B, _, H, W = x_nchw.shape
    assert W % POOL_W == 0, "adaptive-pool emulation assumes W divisible by POOL_W"
    if batch_tile is None:
        # keep >= 2 grid steps when possible (v7x: 2 TensorCores on the 'parallel' axis)
        batch_tile = B // 2 if (B % 2 == 0 and B >= 4) else (1 if B > 1 else B)
    tb = batch_tile
    assert B % tb == 0, "batch must be divisible by the batch tile"
    nblk = B // tb
    hw = H * W

    w_conv, b_conv, mask, pool, w_fc, b_fc, scale, shift = _prepare(params, H, W, tb)
    xc = _im2col(x_nchw)                               # (B*HW, 32) bf16 im2col input

    flops = (2 * B * hw * KPAD * KEXP                  # conv matmul
             + 2 * B * tb * hw * KEXP                  # pooling matmul
             + 2 * B * FC_IN * FC_OUT_PAD)             # fc matmul
    bytes_accessed = (xc.size * 2 + w_conv.size * 2 + w_fc.size * 2
                      + (b_conv.size + mask.size + pool.size + b_fc.size
                         + scale.size + shift.size) * 4
                      + B * FC_OUT_PAD * 4)

    out = pl.pallas_call(
        _fused_forward_kernel,
        out_shape=jax.ShapeDtypeStruct((nblk, tb, FC_OUT_PAD), jnp.float32),
        grid=(nblk,),
        in_specs=[
            pl.BlockSpec((tb * hw, KPAD), lambda g: (g, 0)),        # im2col input tile (bf16)
            pl.BlockSpec((KPAD, KEXP), lambda g: (0, 0)),           # expanded conv taps (bf16)
            pl.BlockSpec((1, KEXP), lambda g: (0, 0)),              # conv bias (f32)
            pl.BlockSpec((tb * hw, KEXP), lambda g: (0, 0)),        # W-bin selection mask (f32)
            pl.BlockSpec((tb, tb * hw), lambda g: (0, 0)),          # per-image averaging (f32)
            pl.BlockSpec((FC_IN, FC_OUT_PAD), lambda g: (0, 0)),    # fc weight, K=240 (bf16)
            pl.BlockSpec((1, FC_OUT_PAD), lambda g: (0, 0)),        # fc bias
            pl.BlockSpec((1, FC_OUT_PAD), lambda g: (0, 0)),        # BN scale (folded)
            pl.BlockSpec((1, FC_OUT_PAD), lambda g: (0, 0)),        # BN shift (folded)
        ],
        out_specs=pl.BlockSpec((None, tb, FC_OUT_PAD), lambda g: (g, 0, 0)),
        compiler_params=pltpu.CompilerParams(
            dimension_semantics=("parallel",)),
        cost_estimate=pl.CostEstimate(flops=int(flops), transcendentals=0,
                                      bytes_accessed=int(bytes_accessed)),
    )(xc, w_conv, b_conv, mask, pool, w_fc, b_fc, scale, shift)

    # x.view(x.size(0), -1) is a no-op on an already-2D tensor.
    # (second self.fc application skipped -- see TODO(synk) at top: shape mismatch in reference)
    return out.reshape(B, FC_OUT_PAD)[:, :FC_OUT]


# ---------------------------------------------------------------------------
# Pure-JAX reference (un-fused), for the numerical checks
# ---------------------------------------------------------------------------
def _reference_forward(x_nchw, params):
    B, _, H, W = x_nchw.shape
    y = jax.lax.conv_general_dilated(
        x_nchw.astype(jnp.float32), params["conv_w"].astype(jnp.float32),
        window_strides=(1, 1), padding=((1, 1), (1, 1)),
        dimension_numbers=("NCHW", "OIHW", "NCHW"),
        precision=jax.lax.Precision.HIGHEST)
    y = jnp.maximum(y + params["conv_b"][None, :, None, None], 0.0)
    wdiv = W // POOL_W
    pooled = y.reshape(B, NUM_FTRS, H, POOL_W, wdiv).mean(axis=(2, 4))    # (B, C, 15)
    feat = pooled.reshape(B, FC_IN)                                       # channel-major flatten
    z = jnp.dot(feat, params["fc_w"].T, precision=jax.lax.Precision.HIGHEST) + params["fc_b"]
    z = jnp.maximum(z, 0.0)
    inv = jax.lax.rsqrt(params["bn_var"] + BN_EPS)
    return (z - params["bn_mean"]) * inv * params["bn_gamma"] + params["bn_beta"]


if __name__ == "__main__":
    key = jax.random.PRNGKey(0)
    ks = jax.random.split(key, 9)

    B, H, W = 4, 8, 30           # small ECG-image-like input, W divisible by POOL_W
    x = jax.random.normal(ks[0], (B, 3, H, W), jnp.float32)

    params = {
        "conv_w": 0.1 * jax.random.normal(ks[1], (NUM_FTRS, 3, 3, 3), jnp.float32),
        "conv_b": 0.1 * jax.random.normal(ks[2], (NUM_FTRS,), jnp.float32),
        "fc_w": 0.05 * jax.random.normal(ks[3], (FC_OUT, FC_IN), jnp.float32),
        "fc_b": 0.05 * jax.random.normal(ks[4], (FC_OUT,), jnp.float32),
        "bn_gamma": 1.0 + 0.1 * jax.random.normal(ks[5], (FC_OUT,), jnp.float32),
        "bn_beta": 0.1 * jax.random.normal(ks[6], (FC_OUT,), jnp.float32),
        "bn_mean": 0.1 * jax.random.normal(ks[7], (FC_OUT,), jnp.float32),
        "bn_var": jnp.abs(jax.random.normal(ks[8], (FC_OUT,), jnp.float32)) + 0.5,
    }

    out = jax.jit(forward)(x, params)
    jax.block_until_ready(out)
    assert out.shape == (B, FC_OUT), out.shape

    # Tight check: reference fed the SAME bf16-rounded MXU operands, all math in f32.
    # Only accumulation order / MXU f32 pass structure differs -> must match to ~1e-5.
    rt = lambda a: a.astype(jnp.bfloat16).astype(jnp.float32)
    params_rounded = dict(params, conv_w=rt(params["conv_w"]), fc_w=rt(params["fc_w"]))
    ref_tight = jax.jit(_reference_forward)(rt(x), params_rounded)
    err_tight = float(jnp.max(jnp.abs(out - ref_tight)))
    assert err_tight < 1e-3, f"fused kernel mismatch vs bf16-operand reference (err={err_tight})"

    # End-to-end check vs the pure-f32 reference (difference = bf16 rounding of MXU operands).
    ref = jax.jit(_reference_forward)(x, params)
    err = float(jnp.max(jnp.abs(out - ref)))
    assert err < 3e-2, f"fused kernel mismatch vs f32 reference (max abs err={err})"

    print("KERNEL_OK")
</pallas_src>

<mosaic_0001>
module attributes {stable_mosaic.version = 11 : i64} {
  func.func @_fused_forward_kernel(%arg0: i32, %arg1: memref<480x32xbf16, #tpu.memory_space<vmem>>, %arg2: memref<32x240xbf16, #tpu.memory_space<vmem>>, %arg3: memref<1x240xf32, #tpu.memory_space<vmem>>, %arg4: memref<480x240xf32, #tpu.memory_space<vmem>>, %arg5: memref<2x480xf32, #tpu.memory_space<vmem>>, %arg6: memref<240x256xbf16, #tpu.memory_space<vmem>>, %arg7: memref<1x256xf32, #tpu.memory_space<vmem>>, %arg8: memref<1x256xf32, #tpu.memory_space<vmem>>, %arg9: memref<1x256xf32, #tpu.memory_space<vmem>>, %arg10: memref<1x2x256xf32, #tpu.memory_space<vmem>>) attributes {dimension_semantics = [#tpu.dimension_semantics<parallel>], iteration_bounds = array<i64: 2>, scalar_prefetch = 0 : i64, scratch_operands = 0 : i64, tpu.core_type = #tpu.core_type<tc>, window_params = [{transform_indices = @transform_0, window_bounds = array<i64: 480, 32>}, {pipeline_mode = #tpu.pipeline_mode<synchronous>, transform_indices = @transform_1, window_bounds = array<i64: 32, 240>}, {pipeline_mode = #tpu.pipeline_mode<synchronous>, transform_indices = @transform_2, window_bounds = array<i64: 1, 240>}, {pipeline_mode = #tpu.pipeline_mode<synchronous>, transform_indices = @transform_3, window_bounds = array<i64: 480, 240>}, {pipeline_mode = #tpu.pipeline_mode<synchronous>, transform_indices = @transform_4, window_bounds = array<i64: 2, 480>}, {pipeline_mode = #tpu.pipeline_mode<synchronous>, transform_indices = @transform_5, window_bounds = array<i64: 240, 256>}, {pipeline_mode = #tpu.pipeline_mode<synchronous>, transform_indices = @transform_6, window_bounds = array<i64: 1, 256>}, {pipeline_mode = #tpu.pipeline_mode<synchronous>, transform_indices = @transform_7, window_bounds = array<i64: 1, 256>}, {pipeline_mode = #tpu.pipeline_mode<synchronous>, transform_indices = @transform_8, window_bounds = array<i64: 1, 256>}, {transform_indices = @transform_9, window_bounds = array<i64: 1, 2, 256>}]} {
    %c0 = arith.constant 0 : index
    %c0_0 = arith.constant 0 : index
    %0 = vector.load %arg1[%c0, %c0_0] : memref<480x32xbf16, #tpu.memory_space<vmem>>, vector<480x32xbf16>
    %c0_1 = arith.constant 0 : index
    %c0_2 = arith.constant 0 : index
    %1 = vector.load %arg2[%c0_1, %c0_2] : memref<32x240xbf16, #tpu.memory_space<vmem>>, vector<32x240xbf16>
    %cst = arith.constant dense<0.000000e+00> : vector<480x240xf32>
    %2 = tpu.matmul %0, %1, %cst {dimension_numbers = #tpu.dot_dimension_numbers<[1], [0], [0], [1], [0, 0, 1, 1], [], []>} : vector<480x32xbf16>, vector<32x240xbf16>, vector<480x240xf32> -> vector<480x240xf32>
    %c0_3 = arith.constant 0 : index
    %c0_4 = arith.constant 0 : index
    %3 = vector.load %arg3[%c0_3, %c0_4] : memref<1x240xf32, #tpu.memory_space<vmem>>, vector<1x240xf32>
    %4 = vector.broadcast %3 : vector<1x240xf32> to vector<480x240xf32>
    %5 = arith.addf %2, %4 : vector<480x240xf32>
    %cst_5 = arith.constant 0.000000e+00 : f32
    %6 = vector.broadcast %cst_5 : f32 to vector<480x240xf32>
    %7 = arith.maximumf %5, %6 : vector<480x240xf32>
    %c0_6 = arith.constant 0 : index
    %c0_7 = arith.constant 0 : index
    %8 = vector.load %arg4[%c0_6, %c0_7] : memref<480x240xf32, #tpu.memory_space<vmem>>, vector<480x240xf32>
    %9 = arith.mulf %7, %8 : vector<480x240xf32>
    %c0_8 = arith.constant 0 : index
    %c0_9 = arith.constant 0 : index
    %10 = vector.load %arg5[%c0_8, %c0_9] : memref<2x480xf32, #tpu.memory_space<vmem>>, vector<2x480xf32>
    %cst_10 = arith.constant dense<0.000000e+00> : vector<2x240xf32>
    %11 = tpu.matmul %10, %9, %cst_10 {dimension_numbers = #tpu.dot_dimension_numbers<[1], [0], [0], [1], [0, 0, 1, 1], [], []>} : vector<2x480xf32>, vector<480x240xf32>, vector<2x240xf32> -> vector<2x240xf32>
    %c0_11 = arith.constant 0 : index
    %c0_12 = arith.constant 0 : index
    %12 = vector.load %arg6[%c0_11, %c0_12] : memref<240x256xbf16, #tpu.memory_space<vmem>>, vector<240x256xbf16>
    %13 = arith.extf %12 : vector<240x256xbf16> to vector<240x256xf32>
    %cst_13 = arith.constant dense<0.000000e+00> : vector<2x256xf32>
    %14 = tpu.matmul %11, %13, %cst_13 {dimension_numbers = #tpu.dot_dimension_numbers<[1], [0], [0], [1], [0, 0, 1, 1], [], []>} : vector<2x240xf32>, vector<240x256xf32>, vector<2x256xf32> -> vector<2x256xf32>
    %c0_14 = arith.constant 0 : index
    %c0_15 = arith.constant 0 : index
    %15 = vector.load %arg7[%c0_14, %c0_15] : memref<1x256xf32, #tpu.memory_space<vmem>>, vector<1x256xf32>
    %16 = vector.broadcast %15 : vector<1x256xf32> to vector<2x256xf32>
    %17 = arith.addf %14, %16 : vector<2x256xf32>
    %cst_16 = arith.constant 0.000000e+00 : f32
    %18 = vector.broadcast %cst_16 : f32 to vector<2x256xf32>
    %19 = arith.maximumf %17, %18 : vector<2x256xf32>
    %c0_17 = arith.constant 0 : index
    %c0_18 = arith.constant 0 : index
    %20 = vector.load %arg8[%c0_17, %c0_18] : memref<1x256xf32, #tpu.memory_space<vmem>>, vector<1x256xf32>
    %21 = vector.broadcast %20 : vector<1x256xf32> to vector<2x256xf32>
    %22 = arith.mulf %19, %21 : vector<2x256xf32>
    %c0_19 = arith.constant 0 : index
    %c0_20 = arith.constant 0 : index
    %23 = vector.load %arg9[%c0_19, %c0_20] : memref<1x256xf32, #tpu.memory_space<vmem>>, vector<1x256xf32>
    %24 = vector.broadcast %23 : vector<1x256xf32> to vector<2x256xf32>
    %25 = arith.addf %22, %24 : vector<2x256xf32>
    %c0_21 = arith.constant 0 : index
    %c0_22 = arith.constant 0 : index
    %c0_23 = arith.constant 0 : index
    %26 = vector.load %arg10[%c0_21, %c0_22, %c0_23] : memref<1x2x256xf32, #tpu.memory_space<vmem>>, vector<1x2x256xf32>
    %27 = vector.shape_cast %26 : vector<1x2x256xf32> to vector<2x256xf32>
    %28 = vector.shape_cast %25 : vector<2x256xf32> to vector<1x2x256xf32>
    tpu.vector_store %arg10[%c0_21, %c0_22, %c0_23], %28 {strides = array<i32>} : memref<1x2x256xf32, #tpu.memory_space<vmem>>, vector<1x2x256xf32>,
    return
  }
  func.func @transform_0(%arg0: i32) -> (i32, i32) {
    %c0_i32 = arith.constant 0 : i32
    %c0_i32_0 = arith.constant 0 : i32
    return %arg0, %c0_i32 : i32, i32
  }
  func.func @transform_1(%arg0: i32) -> (i32, i32) {
    %c0_i32 = arith.constant 0 : i32
    %c0_i32_0 = arith.constant 0 : i32
    %c0_i32_1 = arith.constant 0 : i32
    return %c0_i32, %c0_i32_0 : i32, i32
  }
  func.func @transform_2(%arg0: i32) -> (i32, i32) {
    %c0_i32 = arith.constant 0 : i32
    %c0_i32_0 = arith.constant 0 : i32
    %c0_i32_1 = arith.constant 0 : i32
    return %c0_i32, %c0_i32_0 : i32, i32
  }
  func.func @transform_3(%arg0: i32) -> (i32, i32) {
    %c0_i32 = arith.constant 0 : i32
    %c0_i32_0 = arith.constant 0 : i32
    %c0_i32_1 = arith.constant 0 : i32
    return %c0_i32, %c0_i32_0 : i32, i32
  }
  func.func @transform_4(%arg0: i32) -> (i32, i32) {
    %c0_i32 = arith.constant 0 : i32
    %c0_i32_0 = arith.constant 0 : i32
    %c0_i32_1 = arith.constant 0 : i32
    return %c0_i32, %c0_i32_0 : i32, i32
  }
  func.func @transform_5(%arg0: i32) -> (i32, i32) {
    %c0_i32 = arith.constant 0 : i32
    %c0_i32_0 = arith.constant 0 : i32
    %c0_i32_1 = arith.constant 0 : i32
    return %c0_i32, %c0_i32_0 : i32, i32
  }
  func.func @transform_6(%arg0: i32) -> (i32, i32) {
    %c0_i32 = arith.constant 0 : i32
    %c0_i32_0 = arith.constant 0 : i32
    %c0_i32_1 = arith.constant 0 : i32
    return %c0_i32, %c0_i32_0 : i32, i32
  }
  func.func @transform_7(%arg0: i32) -> (i32, i32) {
    %c0_i32 = arith.constant 0 : i32
    %c0_i32_0 = arith.constant 0 : i32
    %c0_i32_1 = arith.constant 0 : i32
    return %c0_i32, %c0_i32_0 : i32, i32
  }
  func.func @transform_8(%arg0: i32) -> (i32, i32) {
    %c0_i32 = arith.constant 0 : i32
    %c0_i32_0 = arith.constant 0 : i32
    %c0_i32_1 = arith.constant 0 : i32
    return %c0_i32, %c0_i32_0 : i32, i32
  }
  func.func @transform_9(%arg0: i32) -> (i32, i32, i32) {
    %c0_i32 = arith.constant 0 : i32
    %c0_i32_0 = arith.constant 0 : i32
    %c0_i32_1 = arith.constant 0 : i32
    return %arg0, %c0_i32, %c0_i32_0 : i32, i32, i32
  }
}

</mosaic_0001>

<llo_original>
// kernel: tile.17
$region0: #{tile.17}
  %s0 = inlined_call_operand.vmem [shape: f32[16,30,240], index: 0, kind: input, shape index: {}]
  %s1 = inlined_call_operand.vmem [shape: f32[480,240], index: 1, kind: output, shape index: {}]
  %s2 = scalar_lea.vmem %s0, 8
  %v3 = vld [vmem:[%s2] sm:$0xff]
  %vm4 = vcmask 916480
  %s5 = scalar_lea.vmem %s1, 8
  %6 = vst.msk [vmem:[%s5] sm:$0xff] %vm4, %v3
  %s7 = scalar_lea.vmem %s0, 24
  %v8 = vld [vmem:[%s7] sm:$0xff]
  %vm9 = vcmask 916480
  %s10 = scalar_lea.vmem %s1, 24
  %11 = vst.msk [vmem:[%s10] sm:$0xff] %vm9, %v8
  %s12 = scalar_lea.vmem %s0, 40
  %v13 = vld [vmem:[%s12] sm:$0xff]
  %vm14 = vcmask 916480
  %s15 = scalar_lea.vmem %s1, 40
  %16 = vst.msk [vmem:[%s15] sm:$0xff] %vm14, %v13
  %s17 = scalar_lea.vmem %s0, 56
  %v18 = vld [vmem:[%s17] sm:$0x3f]
  %vm19 = vcmask 916480
  %s20 = scalar_lea.vmem %s1, 56
  %21 = vst.msk [vmem:[%s20] sm:$0x3f] %vm19, %v18
  %s22 = scalar_lea.vmem %s0, 72
  %v23 = vld [vmem:[%s22] sm:$0xff]
  %vm24 = vcmask 916480
  %s25 = scalar_lea.vmem %s1, 62
  %26 = vst.msk [vmem:[%s25] sm:$0x3] %vm24, %v23
  %s27 = scalar_lea.vmem %s1, 70
  %28 = vst.msk [vmem:[%s27] sm:$0xfc] %vm24, %v23
  %s29 = scalar_lea.vmem %s0, 88
  %v30 = vld [vmem:[%s29] sm:$0xff]
  %vm31 = vcmask 916480
  %s32 = scalar_lea.vmem %s1, 78
  %33 = vst.msk [vmem:[%s32] sm:$0x3] %vm31, %v30
  %s34 = scalar_lea.vmem %s1, 86
  %35 = vst.msk [vmem:[%s34] sm:$0xfc] %vm31, %v30
  %s36 = scalar_lea.vmem %s0, 104
  %v37 = vld [vmem:[%s36] sm:$0xff]
  %vm38 = vcmask 916480
  %s39 = scalar_lea.vmem %s1, 94
  %40 = vst.msk [vmem:[%s39] sm:$0x3] %vm38, %v37
  %s41 = scalar_lea.vmem %s1, 102
  %42 = vst.msk [vmem:[%s41] sm:$0xfc] %vm38, %v37
  %s43 = scalar_lea.vmem %s0, 120
  %v44 = vld [vmem:[%s43] sm:$0x3f]
  %vm45 = vcmask 916480
  %s46 = scalar_lea.vmem %s1, 110
  %47 = vst.msk [vmem:[%s46] sm:$0x3] %vm45, %v44
  %s48 = scalar_lea.vmem %s1, 118
  %49 = vst.msk [vmem:[%s48] sm:$0x3c] %vm45, %v44
  %s50 = scalar_lea.vmem %s0, 136
  %v51 = vld [vmem:[%s50] sm:$0xff]
  %vm52 = vcmask 916480
  %s53 = scalar_lea.vmem %s1, 124
  %54 = vst.msk [vmem:[%s53] sm:$0xf] %vm52, %v51
  %s55 = scalar_lea.vmem %s1, 132
  %56 = vst.msk [vmem:[%s55] sm:$0xf0] %vm52, %v51
  %s57 = scalar_lea.vmem %s0, 152
  %v58 = vld [vmem:[%s57] sm:$0xff]
  %vm59 = vcmask 916480
  %s60 = scalar_lea.vmem %s1, 140
  %61 = vst.msk [vmem:[%s60] sm:$0xf] %vm59, %v58
  %s62 = scalar_lea.vmem %s1, 148
  %63 = vst.msk [vmem:[%s62] sm:$0xf0] %vm59, %v58
  %s64 = scalar_lea.vmem %s0, 168
  %v65 = vld [vmem:[%s64] sm:$0xff]
  %vm66 = vcmask 916480
  %s67 = scalar_lea.vmem %s1, 156
  %68 = vst.msk [vmem:[%s67] sm:$0xf] %vm66, %v65
  %s69 = scalar_lea.vmem %s1, 164
  %70 = vst.msk [vmem:[%s69] sm:$0xf0] %vm66, %v65
  %s71 = scalar_lea.vmem %s0, 184
  %v72 = vld [vmem:[%s71] sm:$0x3f]
  %vm73 = vcmask 916480
  %s74 = scalar_lea.vmem %s1, 172
  %75 = vst.msk [vmem:[%s74] sm:$0xf] %vm73, %v72
  %s76 = scalar_lea.vmem %s1, 180
  %77 = vst.msk [vmem:[%s76] sm:$0x30] %vm73, %v72
  %s78 = scalar_lea.vmem %s0, 200
  %v79 = vld [vmem:[%s78] sm:$0xff]
  %vm80 = vcmask 916480
  %s81 = scalar_lea.vmem %s1, 186
  %82 = vst.msk [vmem:[%s81] sm:$0x3f] %vm80, %v79
  %s83 = scalar_lea.vmem %s1, 194
  %84 = vst.msk [vmem:[%s83] sm:$0xc0] %vm80, %v79
  %s85 = scalar_lea.vmem %s0, 216
  %v86 = vld [vmem:[%s85] sm:$0xff]
  %vm87 = vcmask 916480
  %s88 = scalar_lea.vmem %s1, 202
  %89 = vst.msk [vmem:[%s88] sm:$0x3f] %vm87, %v86
  %s90 = scalar_lea.vmem %s1, 210
  %91 = vst.msk [vmem:[%s90] sm:$0xc0] %vm87, %v86
  %s92 = scalar_lea.vmem %s0, 232
  %v93 = vld [vmem:[%s92] sm:$0xff]
  %vm94 = vcmask 916480
  %s95 = scalar_lea.vmem %s1, 218
  %96 = vst.msk [vmem:[%s95] sm:$0x3f] %vm94, %v93
  %s97 = scalar_lea.vmem %s1, 226
  %98 = vst.msk [vmem:[%s97] sm:$0xc0] %vm94, %v93
  %s99 = scalar_lea.vmem %s0, 248
  %v100 = vld [vmem:[%s99] sm:$0x3f]
  %vm101 = vcmask 916480
  %s102 = scalar_lea.vmem %s1, 234
  %103 = vst.msk [vmem:[%s102] sm:$0x3f] %vm101, %v100
  %s104 = scalar_lea.vmem %s0, 264
  %v105 = vld [vmem:[%s104] sm:$0xff]
  %vm106 = vcmask 916480
  %s107 = scalar_lea.vmem %s1, 248
  %108 = vst.msk [vmem:[%s107] sm:$0xff] %vm106, %v105
  %s109 = scalar_lea.vmem %s0, 280
  %v110 = vld [vmem:[%s109] sm:$0xff]
  %vm111 = vcmask 916480
  %s112 = scalar_lea.vmem %s1, 264
  %113 = vst.msk [vmem:[%s112] sm:$0xff] %vm111, %v110
  %s114 = scalar_lea.vmem %s0, 296
  %v115 = vld [vmem:[%s114] sm:$0xff]
  %vm116 = vcmask 916480
  %s117 = scalar_lea.vmem %s1, 280
  %118 = vst.msk [vmem:[%s117] sm:$0xff] %vm116, %v115
  %s119 = scalar_lea.vmem %s0, 312
  %v120 = vld [vmem:[%s119] sm:$0x3f]
  %vm121 = vcmask 916480
  %s122 = scalar_lea.vmem %s1, 296
  %123 = vst.msk [vmem:[%s122] sm:$0x3f] %vm121, %v120
  %s124 = scalar_lea.vmem %s0, 328
  %v125 = vld [vmem:[%s124] sm:$0xff]
  %vm126 = vcmask 916480
  %s127 = scalar_lea.vmem %s1, 302
  %128 = vst.msk [vmem:[%s127] sm:$0x3] %vm126, %v125
  %s129 = scalar_lea.vmem %s1, 310
  %130 = vst.msk [vmem:[%s129] sm:$0xfc] %vm126, %v125
  %s131 = scalar_lea.vmem %s0, 344
  %v132 = vld [vmem:[%s131] sm:$0xff]
  %vm133 = vcmask 916480
  %s134 = scalar_lea.vmem %s1, 318
  %135 = vst.msk [vmem:[%s134] sm:$0x3] %vm133, %v132
  %s136 = scalar_lea.vmem %s1, 326
  %137 = vst.msk [vmem:[%s136] sm:$0xfc] %vm133, %v132
  %s138 = scalar_lea.vmem %s0, 360
  %v139 = vld [vmem:[%s138] sm:$0xff]
  %vm140 = vcmask 916480
  %s141 = scalar_lea.vmem %s1, 334
  %142 = vst.msk [vmem:[%s141] sm:$0x3] %vm140, %v139
  %s143 = scalar_lea.vmem %s1, 342
  %144 = vst.msk [vmem:[%s143] sm:$0xfc] %vm140, %v139
  %s145 = scalar_lea.vmem %s0, 376
  %v146 = vld [vmem:[%s145] sm:$0x3f]
  %vm147 = vcmask 916480
  %s148 = scalar_lea.vmem %s1, 350
  %149 = vst.msk [vmem:[%s148] sm:$0x3] %vm147, %v146
  %s150 = scalar_lea.vmem %s1, 358
  %151 = vst.msk [vmem:[%s150] sm:$0x3c] %vm147, %v146
  %s152 = scalar_lea.vmem %s0, 392
  %v153 = vld [vmem:[%s152] sm:$0xff]
  %vm154 = vcmask 916480
  %s155 = scalar_lea.vmem %s1, 364
  %156 = vst.msk [vmem:[%s155] sm:$0xf] %vm154, %v153
  %s157 = scalar_lea.vmem %s1, 372
  %158 = vst.msk [vmem:[%s157] sm:$0xf0] %vm154, %v153
  %s159 = scalar_lea.vmem %s0, 408
  %v160 = vld [vmem:[%s159] sm:$0xff]
  %vm161 = vcmask 916480
  %s162 = scalar_lea.vmem %s1, 380
  %163 = vst.msk [vmem:[%s162] sm:$0xf] %vm161, %v160
  %s164 = scalar_lea.vmem %s1, 388
  %165 = vst.msk [vmem:[%s164] sm:$0xf0] %vm161, %v160
  %s166 = scalar_lea.vmem %s0, 424
  %v167 = vld [vmem:[%s166] sm:$0xff]
  %vm168 = vcmask 916480
  %s169 = scalar_lea.vmem %s1, 396
  %170 = vst.msk [vmem:[%s169] sm:$0xf] %vm168, %v167
  %s171 = scalar_lea.vmem %s1, 404
  %172 = vst.msk [vmem:[%s171] sm:$0xf0] %vm168, %v167
  %s173 = scalar_lea.vmem %s0, 440
  %v174 = vld [vmem:[%s173] sm:$0x3f]
  %vm175 = vcmask 916480
  %s176 = scalar_lea.vmem %s1, 412
  %177 = vst.msk [vmem:[%s176] sm:$0xf] %vm175, %v174
  %s178 = scalar_lea.vmem %s1, 420
  %179 = vst.msk [vmem:[%s178] sm:$0x30] %vm175, %v174
  %s180 = scalar_lea.vmem %s0, 456
  %v181 = vld [vmem:[%s180] sm:$0xff]
  %vm182 = vcmask 916480
  %s183 = scalar_lea.vmem %s1, 426
  %184 = vst.msk [vmem:[%s183] sm:$0x3f] %vm182, %v181
  %s185 = scalar_lea.vmem %s1, 434
  %186 = vst.msk [vmem:[%s185] sm:$0xc0] %vm182, %v181
  %s187 = scalar_lea.vmem %s0, 472
  %v188 = vld [vmem:[%s187] sm:$0xff]
  %vm189 = vcmask 916480
  %s190 = scalar_lea.vmem %s1, 442
  %191 = vst.msk [vmem:[%s190] sm:$0x3f] %vm189, %v188
  %s192 = scalar_lea.vmem %s1, 450
  %193 = vst.msk [vmem:[%s192] sm:$0xc0] %vm189, %v188
  %s194 = scalar_lea.vmem %s0, 488
  %v195 = vld [vmem:[%s194] sm:$0xff]
  %vm196 = vcmask 916480
  %s197 = scalar_lea.vmem %s1, 458
  %198 = vst.msk [vmem:[%s197] sm:$0x3f] %vm196, %v195
  %s199 = scalar_lea.vmem %s1, 466
  %200 = vst.msk [vmem:[%s199] sm:$0xc0] %vm196, %v195
  %s201 = scalar_lea.vmem %s0, 504
  %v202 = vld [vmem:[%s201] sm:$0x3f]
  %vm203 = vcmask 916480
  %s204 = scalar_lea.vmem %s1, 474
  %205 = vst.msk [vmem:[%s204] sm:$0x3f] %vm203, %v202
  %s206 = scalar_lea.vmem %s0, 520
  %v207 = vld [vmem:[%s206] sm:$0xff]
  %vm208 = vcmask 916480
  %s209 = scalar_lea.vmem %s1, 488
  %210 = vst.msk [vmem:[%s209] sm:$0xff] %vm208, %v207
  %s211 = scalar_lea.vmem %s0, 536
  %v212 = vld [vmem:[%s211] sm:$0xff]
  %vm213 = vcmask 916480
  %s214 = scalar_lea.vmem %s1, 504
  %215 = vst.msk [vmem:[%s214] sm:$0xff] %vm213, %v212
  %s216 = scalar_lea.vmem %s0, 552
  %v217 = vld [vmem:[%s216] sm:$0xff]
  %vm218 = vcmask 916480
  %s219 = scalar_lea.vmem %s1, 520
  %220 = vst.msk [vmem:[%s219] sm:$0xff] %vm218, %v217
  %s221 = scalar_lea.vmem %s0, 568
  %v222 = vld [vmem:[%s221] sm:$0x3f]
  %vm223 = vcmask 916480
  %s224 = scalar_lea.vmem %s1, 536
  %225 = vst.msk [vmem:[%s224] sm:$0x3f] %vm223, %v222
  %s226 = scalar_lea.vmem %s0, 584
  %v227 = vld [vmem:[%s226] sm:$0xff]
  %vm228 = vcmask 916480
  %s229 = scalar_lea.vmem %s1, 542
  %230 = vst.msk [vmem:[%s229] sm:$0x3] %vm228, %v227
  %s231 = scalar_lea.vmem %s1, 550
  %232 = vst.msk [vmem:[%s231] sm:$0xfc] %vm228, %v227
  %s233 = scalar_lea.vmem %s0, 600
  %v234 = vld [vmem:[%s233] sm:$0xff]
  %vm235 = vcmask 916480
  %s236 = scalar_lea.vmem %s1, 558
  %237 = vst.msk [vmem:[%s236] sm:$0x3] %vm235, %v234
  %s238 = scalar_lea.vmem %s1, 566
  %239 = vst.msk [vmem:[%s238] sm:$0xfc] %vm235, %v234
  %s240 = scalar_lea.vmem %s0, 616
  %v241 = vld [vmem:[%s240] sm:$0xff]
  %vm242 = vcmask 916480
  %s243 = scalar_lea.vmem %s1, 574
  %244 = vst.msk [vmem:[%s243] sm:$0x3] %vm242, %v241
  %s245 = scalar_lea.vmem %s1, 582
  %246 = vst.msk [vmem:[%s245] sm:$0xfc] %vm242, %v241
  %s247 = scalar_lea.vmem %s0, 632
  %v248 = vld [vmem:[%s247] sm:$0x3f]
  %vm249 = vcmask 916480
  %s250 = scalar_lea.vmem %s1, 590
  %251 = vst.msk [vmem:[%s250] sm:$0x3] %vm249, %v248
  %s252 = scalar_lea.vmem %s1, 598
  %253 = vst.msk [vmem:[%s252] sm:$0x3c] %vm249, %v248
  %s254 = scalar_lea.vmem %s0, 648
  %v255 = vld [vmem:[%s254] sm:$0xff]
  %vm256 = vcmask 916480
  %s257 = scalar_lea.vmem %s1, 604
  %258 = vst.msk [vmem:[%s257] sm:$0xf] %vm256, %v255
  %s259 = scalar_lea.vmem %s1, 612
  %260 = vst.msk [vmem:[%s259] sm:$0xf0] %vm256, %v255
  %s261 = scalar_lea.vmem %s0, 664
  %v262 = vld [vmem:[%s261] sm:$0xff]
  %vm263 = vcmask 916480
  %s264 = scalar_lea.vmem %s1, 620
  %265 = vst.msk [vmem:[%s264] sm:$0xf] %vm263, %v262
  %s266 = scalar_lea.vmem %s1, 628
  %267 = vst.msk [vmem:[%s266] sm:$0xf0] %vm263, %v262
  %s268 = scalar_lea.vmem %s0, 680
  %v269 = vld [vmem:[%s268] sm:$0xff]
  %vm270 = vcmask 916480
  %s271 = scalar_lea.vmem %s1, 636
  %272 = vst.msk [vmem:[%s271] sm:$0xf] %vm270, %v269
  %s273 = scalar_lea.vmem %s1, 644
  %274 = vst.msk [vmem:[%s273] sm:$0xf0] %vm270, %v269
  %s275 = scalar_lea.vmem %s0, 696
  %v276 = vld [vmem:[%s275] sm:$0x3f]
  %vm277 = vcmask 916480
  %s278 = scalar_lea.vmem %s1, 652
  %279 = vst.msk [vmem:[%s278] sm:$0xf] %vm277, %v276
  %s280 = scalar_lea.vmem %s1, 660
  %281 = vst.msk [vmem:[%s280] sm:$0x30] %vm277, %v276
  %s282 = scalar_lea.vmem %s0, 712
  %v283 = vld [vmem:[%s282] sm:$0xff]
  %vm284 = vcmask 916480
  %s285 = scalar_lea.vmem %s1, 666
  %286 = vst.msk [vmem:[%s285] sm:$0x3f] %vm284, %v283
  %s287 = scalar_lea.vmem %s1, 674
  %288 = vst.msk [vmem:[%s287] sm:$0xc0] %vm284, %v283
  %s289 = scalar_lea.vmem %s0, 728
  %v290 = vld [vmem:[%s289] sm:$0xff]
  %vm291 = vcmask 916480
  %s292 = scalar_lea.vmem %s1, 682
  %293 = vst.msk [vmem:[%s292] sm:$0x3f] %vm291, %v290
  %s294 = scalar_lea.vmem %s1, 690
  %295 = vst.msk [vmem:[%s294] sm:$0xc0] %vm291, %v290
  %s296 = scalar_lea.vmem %s0, 744
  %v297 = vld [vmem:[%s296] sm:$0xff]
  %vm298 = vcmask 916480
  %s299 = scalar_lea.vmem %s1, 698
  %300 = vst.msk [vmem:[%s299] sm:$0x3f] %vm298, %v297
  %s301 = scalar_lea.vmem %s1, 706
  %302 = vst.msk [vmem:[%s301] sm:$0xc0] %vm298, %v297
  %s303 = scalar_lea.vmem %s0, 760
  %v304 = vld [vmem:[%s303] sm:$0x3f]
  %vm305 = vcmask 916480
  %s306 = scalar_lea.vmem %s1, 714
  %307 = vst.msk [vmem:[%s306] sm:$0x3f] %vm305, %v304
  %s308 = scalar_lea.vmem %s0, 776
  %v309 = vld [vmem:[%s308] sm:$0xff]
  %vm310 = vcmask 916480
  %s311 = scalar_lea.vmem %s1, 728
  %312 = vst.msk [vmem:[%s311] sm:$0xff] %vm310, %v309
  %s313 = scalar_lea.vmem %s0, 792
  %v314 = vld [vmem:[%s313] sm:$0xff]
  %vm315 = vcmask 916480
  %s316 = scalar_lea.vmem %s1, 744
  %317 = vst.msk [vmem:[%s316] sm:$0xff] %vm315, %v314
  %s318 = scalar_lea.vmem %s0, 808
  %v319 = vld [vmem:[%s318] sm:$0xff]
  %vm320 = vcmask 916480
  %s321 = scalar_lea.vmem %s1, 760
  %322 = vst.msk [vmem:[%s321] sm:$0xff] %vm320, %v319
  %s323 = scalar_lea.vmem %s0, 824
  %v324 = vld [vmem:[%s323] sm:$0x3f]
  %vm325 = vcmask 916480
  %s326 = scalar_lea.vmem %s1, 776
  %327 = vst.msk [vmem:[%s326] sm:$0x3f] %vm325, %v324
  %s328 = scalar_lea.vmem %s0, 840
  %v329 = vld [vmem:[%s328] sm:$0xff]
  %vm330 = vcmask 916480
  %s331 = scalar_lea.vmem %s1, 782
  %332 = vst.msk [vmem:[%s331] sm:$0x3] %vm330, %v329
  %s333 = scalar_lea.vmem %s1, 790
  %334 = vst.msk [vmem:[%s333] sm:$0xfc] %vm330, %v329
  %s335 = scalar_lea.vmem %s0, 856
  %v336 = vld [vmem:[%s335] sm:$0xff]
  %vm337 = vcmask 916480
  %s338 = scalar_lea.vmem %s1, 798
  %339 = vst.msk [vmem:[%s338] sm:$0x3] %vm337, %v336
  %s340 = scalar_lea.vmem %s1, 806
  %341 = vst.msk [vmem:[%s340] sm:$0xfc] %vm337, %v336
  %s342 = scalar_lea.vmem %s0, 872
  %v343 = vld [vmem:[%s342] sm:$0xff]
  %vm344 = vcmask 916480
  %s345 = scalar_lea.vmem %s1, 814
  %346 = vst.msk [vmem:[%s345] sm:$0x3] %vm344, %v343
  %s347 = scalar_lea.vmem %s1, 822
  %348 = vst.msk [vmem:[%s347] sm:$0xfc] %vm344, %v343
  %s349 = scalar_lea.vmem %s0, 888
  %v350 = vld [vmem:[%s349] sm:$0x3f]
  %vm351 = vcmask 916480
  %s352 = scalar_lea.vmem %s1, 830
  %353 = vst.msk [vmem:[%s352] sm:$0x3] %vm351, %v350
  %s354 = scalar_lea.vmem %s1, 838
  %355 = vst.msk [vmem:[%s354] sm:$0x3c] %vm351, %v350
  %s356 = scalar_lea.vmem %s0, 904
  %v357 = vld [vmem:[%s356] sm:$0xff]
  %vm358 = vcmask 916480
  %s359 = scalar_lea.vmem %s1, 844
  %360 = vst.msk [vmem:[%s359] sm:$0xf] %vm358, %v357
  %s361 = scalar_lea.vmem %s1, 852
  %362 = vst.msk [vmem:[%s361] sm:$0xf0] %vm358, %v357
  %s363 = scalar_lea.vmem %s0, 920
  %v364 = vld [vmem:[%s363] sm:$0xff]
  %vm365 = vcmask 916480
  %s366 = scalar_lea.vmem %s1, 860
  %367 = vst.msk [vmem:[%s366] sm:$0xf] %vm365, %v364
  %s368 = scalar_lea.vmem %s1, 868
  %369 = vst.msk [vmem:[%s368] sm:$0xf0] %vm365, %v364
  %s370 = scalar_lea.vmem %s0, 936
  %v371 = vld [vmem:[%s370] sm:$0xff]
  %vm372 = vcmask 916480
  %s373 = scalar_lea.vmem %s1, 876
  %374 = vst.msk [vmem:[%s373] sm:$0xf] %vm372, %v371
  %s375 = scalar_lea.vmem %s1, 884
  %376 = vst.msk [vmem:[%s375] sm:$0xf0] %vm372, %v371
  %s377 = scalar_lea.vmem %s0, 952
  %v378 = vld [vmem:[%s377] sm:$0x3f]
  %vm379 = vcmask 916480
  %s380 = scalar_lea.vmem %s1, 892
  %381 = vst.msk [vmem:[%s380] sm:$0xf] %vm379, %v378
  %s382 = scalar_lea.vmem %s1, 900
  %383 = vst.msk [vmem:[%s382] sm:$0x30] %vm379, %v378
  %s384 = scalar_lea.vmem %s0, 968
  %v385 = vld [vmem:[%s384] sm:$0xff]
  %vm386 = vcmask 916480
  %s387 = scalar_lea.vmem %s1, 906
  %388 = vst.msk [vmem:[%s387] sm:$0x3f] %vm386, %v385
  %s389 = scalar_lea.vmem %s1, 914
  %390 = vst.msk [vmem:[%s389] sm:$0xc0] %vm386, %v385
  %s391 = scalar_lea.vmem %s0, 984
  %v392 = vld [vmem:[%s391] sm:$0xff]
  %vm393 = vcmask 916480
  %s394 = scalar_lea.vmem %s1, 922
  %395 = vst.msk [vmem:[%s394] sm:$0x3f] %vm393, %v392
  %s396 = scalar_lea.vmem %s1, 930
  %397 = vst.msk [vmem:[%s396] sm:$0xc0] %vm393, %v392
  %s398 = scalar_lea.vmem %s0, 1000
  %v399 = vld [vmem:[%s398] sm:$0xff]
  %vm400 = vcmask 916480
  %s401 = scalar_lea.vmem %s1, 938
  %402 = vst.msk [vmem:[%s401] sm:$0x3f] %vm400, %v399
  %s403 = scalar_lea.vmem %s1, 946
  %404 = vst.msk [vmem:[%s403] sm:$0xc0] %vm400, %v399
  %s405 = scalar_lea.vmem %s0, 1016
  %v406 = vld [vmem:[%s405] sm:$0x3f]
  %vm407 = vcmask 916480
  %s408 = scalar_lea.vmem %s1, 954
  %409 = vst.msk [vmem:[%s408] sm:$0x3f] %vm407, %v406
  %v410 = vld [vmem:[%s0] sm:$0xff]
  %411 = vst [vmem:[%s1] sm:$0xff] %v410
  %s412 = scalar_lea.vmem %s0, 16
  %v413 = vld [vmem:[%s412] sm:$0xff]
  %s414 = scalar_lea.vmem %s1, 16
  %415 = vst [vmem:[%s414] sm:$0xff] %v413
  %s416 = scalar_lea.vmem %s0, 32
  %v417 = vld [vmem:[%s416] sm:$0xff]
  %s418 = scalar_lea.vmem %s1, 32
  %419 = vst [vmem:[%s418] sm:$0xff] %v417
  %s420 = scalar_lea.vmem %s0, 48
  %v421 = vld [vmem:[%s420] sm:$0x3f]
  %s422 = scalar_lea.vmem %s1, 48
  %423 = vst [vmem:[%s422] sm:$0x3f] %v421
  %s424 = scalar_lea.vmem %s0, 64
  %v425 = vld [vmem:[%s424] sm:$0xff]
  %s426 = scalar_lea.vmem %s1, 54
  %427 = vst [vmem:[%s426] sm:$0x3] %v425
  %s428 = scalar_lea.vmem %s1, 62
  %429 = vst [vmem:[%s428] sm:$0xfc] %v425
  %s430 = scalar_lea.vmem %s0, 80
  %v431 = vld [vmem:[%s430] sm:$0xff]
  %s432 = scalar_lea.vmem %s1, 70
  %433 = vst [vmem:[%s432] sm:$0x3] %v431
  %s434 = scalar_lea.vmem %s1, 78
  %435 = vst [vmem:[%s434] sm:$0xfc] %v431
  %s436 = scalar_lea.vmem %s0, 96
  %v437 = vld [vmem:[%s436] sm:$0xff]
  %s438 = scalar_lea.vmem %s1, 86
  %439 = vst [vmem:[%s438] sm:$0x3] %v437
  %s440 = scalar_lea.vmem %s1, 94
  %441 = vst [vmem:[%s440] sm:$0xfc] %v437
  %s442 = scalar_lea.vmem %s0, 112
  %v443 = vld [vmem:[%s442] sm:$0x3f]
  %s444 = scalar_lea.vmem %s1, 102
  %445 = vst [vmem:[%s444] sm:$0x3] %v443
  %s446 = scalar_lea.vmem %s1, 110
  %447 = vst [vmem:[%s446] sm:$0x3c] %v443
  %s448 = scalar_lea.vmem %s0, 128
  %v449 = vld [vmem:[%s448] sm:$0xff]
  %s450 = scalar_lea.vmem %s1, 116
  %451 = vst [vmem:[%s450] sm:$0xf] %v449
  %s452 = scalar_lea.vmem %s1, 124
  %453 = vst [vmem:[%s452] sm:$0xf0] %v449
  %s454 = scalar_lea.vmem %s0, 144
  %v455 = vld [vmem:[%s454] sm:$0xff]
  %s456 = scalar_lea.vmem %s1, 132
  %457 = vst [vmem:[%s456] sm:$0xf] %v455
  %s458 = scalar_lea.vmem %s1, 140
  %459 = vst [vmem:[%s458] sm:$0xf0] %v455
  %s460 = scalar_lea.vmem %s0, 160
  %v461 = vld [vmem:[%s460] sm:$0xff]
  %s462 = scalar_lea.vmem %s1, 148
  %463 = vst [vmem:[%s462] sm:$0xf] %v461
  %s464 = scalar_lea.vmem %s1, 156
  %465 = vst [vmem:[%s464] sm:$0xf0] %v461
  %s466 = scalar_lea.vmem %s0, 176
  %v467 = vld [vmem:[%s466] sm:$0x3f]
  %s468 = scalar_lea.vmem %s1, 164
  %469 = vst [vmem:[%s468] sm:$0xf] %v467
  %s470 = scalar_lea.vmem %s1, 172
  %471 = vst [vmem:[%s470] sm:$0x30] %v467
  %s472 = scalar_lea.vmem %s0, 192
  %v473 = vld [vmem:[%s472] sm:$0xff]
  %s474 = scalar_lea.vmem %s1, 178
  %475 = vst [vmem:[%s474] sm:$0x3f] %v473
  %s476 = scalar_lea.vmem %s1, 186
  %477 = vst [vmem:[%s476] sm:$0xc0] %v473
  %s478 = scalar_lea.vmem %s0, 208
  %v479 = vld [vmem:[%s478] sm:$0xff]
  %s480 = scalar_lea.vmem %s1, 194
  %481 = vst [vmem:[%s480] sm:$0x3f] %v479
  %s482 = scalar_lea.vmem %s1, 202
  %483 = vst [vmem:[%s482] sm:$0xc0] %v479
  %s484 = scalar_lea.vmem %s0, 224
  %v485 = vld [vmem:[%s484] sm:$0xff]
  %s486 = scalar_lea.vmem %s1, 210
  %487 = vst [vmem:[%s486] sm:$0x3f] %v485
  %s488 = scalar_lea.vmem %s1, 218
  %489 = vst [vmem:[%s488] sm:$0xc0] %v485
  %s490 = scalar_lea.vmem %s0, 240
  %v491 = vld [vmem:[%s490] sm:$0x3f]
  %s492 = scalar_lea.vmem %s1, 226
  %493 = vst [vmem:[%s492] sm:$0x3f] %v491
  %s494 = scalar_lea.vmem %s0, 256
  %v495 = vld [vmem:[%s494] sm:$0xff]
  %s496 = scalar_lea.vmem %s1, 240
  %497 = vst [vmem:[%s496] sm:$0xff] %v495
  %s498 = scalar_lea.vmem %s0, 272
  %v499 = vld [vmem:[%s498] sm:$0xff]
  %s500 = scalar_lea.vmem %s1, 256
  %501 = vst [vmem:[%s500] sm:$0xff] %v499
  %s502 = scalar_lea.vmem %s0, 288
  %v503 = vld [vmem:[%s502] sm:$0xff]
  %s504 = scalar_lea.vmem %s1, 272
  %505 = vst [vmem:[%s504] sm:$0xff] %v503
  %s506 = scalar_lea.vmem %s0, 304
  %v507 = vld [vmem:[%s506] sm:$0x3f]
  %s508 = scalar_lea.vmem %s1, 288
  %509 = vst [vmem:[%s508] sm:$0x3f] %v507
  %s510 = scalar_lea.vmem %s0, 320
  %v511 = vld [vmem:[%s510] sm:$0xff]
  %s512 = scalar_lea.vmem %s1, 294
  %513 = vst [vmem:[%s512] sm:$0x3] %v511
  %s514 = scalar_lea.vmem %s1, 302
  %515 = vst [vmem:[%s514] sm:$0xfc] %v511
  %s516 = scalar_lea.vmem %s0, 336
  %v517 = vld [vmem:[%s516] sm:$0xff]
  %s518 = scalar_lea.vmem %s1, 310
  %519 = vst [vmem:[%s518] sm:$0x3] %v517
  %s520 = scalar_lea.vmem %s1, 318
  %521 = vst [vmem:[%s520] sm:$0xfc] %v517
  %s522 = scalar_lea.vmem %s0, 352
  %v523 = vld [vmem:[%s522] sm:$0xff]
  %s524 = scalar_lea.vmem %s1, 326
  %525 = vst [vmem:[%s524] sm:$0x3] %v523
  %s526 = scalar_lea.vmem %s1, 334
  %527 = vst [vmem:[%s526] sm:$0xfc] %v523
  %s528 = scalar_lea.vmem %s0, 368
  %v529 = vld [vmem:[%s528] sm:$0x3f]
  %s530 = scalar_lea.vmem %s1, 342
  %531 = vst [vmem:[%s530] sm:$0x3] %v529
  %s532 = scalar_lea.vmem %s1, 350
  %533 = vst [vmem:[%s532] sm:$0x3c] %v529
  %s534 = scalar_lea.vmem %s0, 384
  %v535 = vld [vmem:[%s534] sm:$0xff]
  %s536 = scalar_lea.vmem %s1, 356
  %537 = vst [vmem:[%s536] sm:$0xf] %v535
  %s538 = scalar_lea.vmem %s1, 364
  %539 = vst [vmem:[%s538] sm:$0xf0] %v535
  %s540 = scalar_lea.vmem %s0, 400
  %v541 = vld [vmem:[%s540] sm:$0xff]
  %s542 = scalar_lea.vmem %s1, 372
  %543 = vst [vmem:[%s542] sm:$0xf] %v541
  %s544 = scalar_lea.vmem %s1, 380
  %545 = vst [vmem:[%s544] sm:$0xf0] %v541
  %s546 = scalar_lea.vmem %s0, 416
  %v547 = vld [vmem:[%s546] sm:$0xff]
  %s548 = scalar_lea.vmem %s1, 388
  %549 = vst [vmem:[%s548] sm:$0xf] %v547
  %s550 = scalar_lea.vmem %s1, 396
  %551 = vst [vmem:[%s550] sm:$0xf0] %v547
  %s552 = scalar_lea.vmem %s0, 432
  %v553 = vld [vmem:[%s552] sm:$0x3f]
  %s554 = scalar_lea.vmem %s1, 404
  %555 = vst [vmem:[%s554] sm:$0xf] %v553
  %s556 = scalar_lea.vmem %s1, 412
  %557 = vst [vmem:[%s556] sm:$0x30] %v553
  %s558 = scalar_lea.vmem %s0, 448
  %v559 = vld [vmem:[%s558] sm:$0xff]
  %s560 = scalar_lea.vmem %s1, 418
  %561 = vst [vmem:[%s560] sm:$0x3f] %v559
  %s562 = scalar_lea.vmem %s1, 426
  %563 = vst [vmem:[%s562] sm:$0xc0] %v559
  %s564 = scalar_lea.vmem %s0, 464
  %v565 = vld [vmem:[%s564] sm:$0xff]
  %s566 = scalar_lea.vmem %s1, 434
  %567 = vst [vmem:[%s566] sm:$0x3f] %v565
  %s568 = scalar_lea.vmem %s1, 442
  %569 = vst [vmem:[%s568] sm:$0xc0] %v565
  %s570 = scalar_lea.vmem %s0, 480
  %v571 = vld [vmem:[%s570] sm:$0xff]
  %s572 = scalar_lea.vmem %s1, 450
  %573 = vst [vmem:[%s572] sm:$0x3f] %v571
  %s574 = scalar_lea.vmem %s1, 458
  %575 = vst [vmem:[%s574] sm:$0xc0] %v571
  %s576 = scalar_lea.vmem %s0, 496
  %v577 = vld [vmem:[%s576] sm:$0x3f]
  %s578 = scalar_lea.vmem %s1, 466
  %579 = vst [vmem:[%s578] sm:$0x3f] %v577
  %s580 = scalar_lea.vmem %s0, 512
  %v581 = vld [vmem:[%s580] sm:$0xff]
  %s582 = scalar_lea.vmem %s1, 480
  %583 = vst [vmem:[%s582] sm:$0xff] %v581
  %s584 = scalar_lea.vmem %s0, 528
  %v585 = vld [vmem:[%s584] sm:$0xff]
  %s586 = scalar_lea.vmem %s1, 496
  %587 = vst [vmem:[%s586] sm:$0xff] %v585
  %s588 = scalar_lea.vmem %s0, 544
  %v589 = vld [vmem:[%s588] sm:$0xff]
  %s590 = scalar_lea.vmem %s1, 512
  %591 = vst [vmem:[%s590] sm:$0xff] %v589
  %s592 = scalar_lea.vmem %s0, 560
  %v593 = vld [vmem:[%s592] sm:$0x3f]
  %s594 = scalar_lea.vmem %s1, 528
  %595 = vst [vmem:[%s594] sm:$0x3f] %v593
  %s596 = scalar_lea.vmem %s0, 576
  %v597 = vld [vmem:[%s596] sm:$0xff]
  %s598 = scalar_lea.vmem %s1, 534
  %599 = vst [vmem:[%s598] sm:$0x3] %v597
  %s600 = scalar_lea.vmem %s1, 542
  %601 = vst [vmem:[%s600] sm:$0xfc] %v597
  %s602 = scalar_lea.vmem %s0, 592
  %v603 = vld [vmem:[%s602] sm:$0xff]
  %s604 = scalar_lea.vmem %s1, 550
  %605 = vst [vmem:[%s604] sm:$0x3] %v603
  %s606 = scalar_lea.vmem %s1, 558
  %607 = vst [vmem:[%s606] sm:$0xfc] %v603
  %s608 = scalar_lea.vmem %s0, 608
  %v609 = vld [vmem:[%s608] sm:$0xff]
  %s610 = scalar_lea.vmem %s1, 566
  %611 = vst [vmem:[%s610] sm:$0x3] %v609
  %s612 = scalar_lea.vmem %s1, 574
  %613 = vst [vmem:[%s612] sm:$0xfc] %v609
  %s614 = scalar_lea.vmem %s0, 624
  %v615 = vld [vmem:[%s614] sm:$0x3f]
  %s616 = scalar_lea.vmem %s1, 582
  %617 = vst [vmem:[%s616] sm:$0x3] %v615
  %s618 = scalar_lea.vmem %s1, 590
  %619 = vst [vmem:[%s618] sm:$0x3c] %v615
  %s620 = scalar_lea.vmem %s0, 640
  %v621 = vld [vmem:[%s620] sm:$0xff]
  %s622 = scalar_lea.vmem %s1, 596
  %623 = vst [vmem:[%s622] sm:$0xf] %v621
  %s624 = scalar_lea.vmem %s1, 604
  %625 = vst [vmem:[%s624] sm:$0xf0] %v621
  %s626 = scalar_lea.vmem %s0, 656
  %v627 = vld [vmem:[%s626] sm:$0xff]
  %s628 = scalar_lea.vmem %s1, 612
  %629 = vst [vmem:[%s628] sm:$0xf] %v627
  %s630 = scalar_lea.vmem %s1, 620
  %631 = vst [vmem:[%s630] sm:$0xf0] %v627
  %s632 = scalar_lea.vmem %s0, 672
  %v633 = vld [vmem:[%s632] sm:$0xff]
  %s634 = scalar_lea.vmem %s1, 628
  %635 = vst [vmem:[%s634] sm:$0xf] %v633
  %s636 = scalar_lea.vmem %s1, 636
  %637 = vst [vmem:[%s636] sm:$0xf0] %v633
  %s638 = scalar_lea.vmem %s0, 688
  %v639 = vld [vmem:[%s638] sm:$0x3f]
  %s640 = scalar_lea.vmem %s1, 644
  %641 = vst [vmem:[%s640] sm:$0xf] %v639
  %s642 = scalar_lea.vmem %s1, 652
  %643 = vst [vmem:[%s642] sm:$0x30] %v639
  %s644 = scalar_lea.vmem %s0, 704
  %v645 = vld [vmem:[%s644] sm:$0xff]
  %s646 = scalar_lea.vmem %s1, 658
  %647 = vst [vmem:[%s646] sm:$0x3f] %v645
  %s648 = scalar_lea.vmem %s1, 666
  %649 = vst [vmem:[%s648] sm:$0xc0] %v645
  %s650 = scalar_lea.vmem %s0, 720
  %v651 = vld [vmem:[%s650] sm:$0xff]
  %s652 = scalar_lea.vmem %s1, 674
  %653 = vst [vmem:[%s652] sm:$0x3f] %v651
  %s654 = scalar_lea.vmem %s1, 682
  %655 = vst [vmem:[%s654] sm:$0xc0] %v651
  %s656 = scalar_lea.vmem %s0, 736
  %v657 = vld [vmem:[%s656] sm:$0xff]
  %s658 = scalar_lea.vmem %s1, 690
  %659 = vst [vmem:[%s658] sm:$0x3f] %v657
  %s660 = scalar_lea.vmem %s1, 698
  %661 = vst [vmem:[%s660] sm:$0xc0] %v657
  %s662 = scalar_lea.vmem %s0, 752
  %v663 = vld [vmem:[%s662] sm:$0x3f]
  %s664 = scalar_lea.vmem %s1, 706
  %665 = vst [vmem:[%s664] sm:$0x3f] %v663
  %s666 = scalar_lea.vmem %s0, 768
  %v667 = vld [vmem:[%s666] sm:$0xff]
  %s668 = scalar_lea.vmem %s1, 720
  %669 = vst [vmem:[%s668] sm:$0xff] %v667
  %s670 = scalar_lea.vmem %s0, 784
  %v671 = vld [vmem:[%s670] sm:$0xff]
  %s672 = scalar_lea.vmem %s1, 736
  %673 = vst [vmem:[%s672] sm:$0xff] %v671
  %s674 = scalar_lea.vmem %s0, 800
  %v675 = vld [vmem:[%s674] sm:$0xff]
  %s676 = scalar_lea.vmem %s1, 752
  %677 = vst [vmem:[%s676] sm:$0xff] %v675
  %s678 = scalar_lea.vmem %s0, 816
  %v679 = vld [vmem:[%s678] sm:$0x3f]
  %s680 = scalar_lea.vmem %s1, 768
  %681 = vst [vmem:[%s680] sm:$0x3f] %v679
  %s682 = scalar_lea.vmem %s0, 832
  %v683 = vld [vmem:[%s682] sm:$0xff]
  %s684 = scalar_lea.vmem %s1, 774
  %685 = vst [vmem:[%s684] sm:$0x3] %v683
  %s686 = scalar_lea.vmem %s1, 782
  %687 = vst [vmem:[%s686] sm:$0xfc] %v683
  %s688 = scalar_lea.vmem %s0, 848
  %v689 = vld [vmem:[%s688] sm:$0xff]
  %s690 = scalar_lea.vmem %s1, 790
  %691 = vst [vmem:[%s690] sm:$0x3] %v689
  %s692 = scalar_lea.vmem %s1, 798
  %693 = vst [vmem:[%s692] sm:$0xfc] %v689
  %s694 = scalar_lea.vmem %s0, 864
  %v695 = vld [vmem:[%s694] sm:$0xff]
  %s696 = scalar_lea.vmem %s1, 806
  %697 = vst [vmem:[%s696] sm:$0x3] %v695
  %s698 = scalar_lea.vmem %s1, 814
  %699 = vst [vmem:[%s698] sm:$0xfc] %v695
  %s700 = scalar_lea.vmem %s0, 880
  %v701 = vld [vmem:[%s700] sm:$0x3f]
  %s702 = scalar_lea.vmem %s1, 822
  %703 = vst [vmem:[%s702] sm:$0x3] %v701
  %s704 = scalar_lea.vmem %s1, 830
  %705 = vst [vmem:[%s704] sm:$0x3c] %v701
  %s706 = scalar_lea.vmem %s0, 896
  %v707 = vld [vmem:[%s706] sm:$0xff]
  %s708 = scalar_lea.vmem %s1, 836
  %709 = vst [vmem:[%s708] sm:$0xf] %v707
  %s710 = scalar_lea.vmem %s1, 844
  %711 = vst [vmem:[%s710] sm:$0xf0] %v707
  %s712 = scalar_lea.vmem %s0, 912
  %v713 = vld [vmem:[%s712] sm:$0xff]
  %s714 = scalar_lea.vmem %s1, 852
  %715 = vst [vmem:[%s714] sm:$0xf] %v713
  %s716 = scalar_lea.vmem %s1, 860
  %717 = vst [vmem:[%s716] sm:$0xf0] %v713
  %s718 = scalar_lea.vmem %s0, 928
  %v719 = vld [vmem:[%s718] sm:$0xff]
  %s720 = scalar_lea.vmem %s1, 868
  %721 = vst [vmem:[%s720] sm:$0xf] %v719
  %s722 = scalar_lea.vmem %s1, 876
  %723 = vst [vmem:[%s722] sm:$0xf0] %v719
  %s724 = scalar_lea.vmem %s0, 944
  %v725 = vld [vmem:[%s724] sm:$0x3f]
  %s726 = scalar_lea.vmem %s1, 884
  %727 = vst [vmem:[%s726] sm:$0xf] %v725
  %s728 = scalar_lea.vmem %s1, 892
  %729 = vst [vmem:[%s728] sm:$0x30] %v725
  %s730 = scalar_lea.vmem %s0, 960
  %v731 = vld [vmem:[%s730] sm:$0xff]
  %s732 = scalar_lea.vmem %s1, 898
  %733 = vst [vmem:[%s732] sm:$0x3f] %v731
  %s734 = scalar_lea.vmem %s1, 906
  %735 = vst [vmem:[%s734] sm:$0xc0] %v731
  %s736 = scalar_lea.vmem %s0, 976
  %v737 = vld [vmem:[%s736] sm:$0xff]
  %s738 = scalar_lea.vmem %s1, 914
  %739 = vst [vmem:[%s738] sm:$0x3f] %v737
  %s740 = scalar_lea.vmem %s1, 922
  %741 = vst [vmem:[%s740] sm:$0xc0] %v737
  %s742 = scalar_lea.vmem %s0, 992
  %v743 = vld [vmem:[%s742] sm:$0xff]
  %s744 = scalar_lea.vmem %s1, 930
  %745 = vst [vmem:[%s744] sm:$0x3f] %v743
  %s746 = scalar_lea.vmem %s1, 938
  %747 = vst [vmem:[%s746] sm:$0xc0] %v743
  %s748 = scalar_lea.vmem %s0, 1008
  %v749 = vld [vmem:[%s748] sm:$0x3f]
  %s750 = scalar_lea.vmem %s1, 946
  %751 = vst [vmem:[%s750] sm:$0x3f] %v749

// kernel: forward.1
$region0: #{forward.1}
  #allocation0 [shape = 'u32[]', space=smem, size = 0x4, offset = 0x4, fixed_abs, tag = 'smem constant byte address 0x4 - core index']
  #allocation1 [shape = 'u32[144,128]{1,0:T(1,128)}', space=vmem, size = 0x12000, scoped, tag = 'internal scratch']
  %s0 = inlined_call_operand.vmem [shape: bf16[960,32], index: 0, kind: input, shape index: {}]
  %s1 = inlined_call_operand.vmem [shape: bf16[32,240], index: 1, kind: input, shape index: {}]
  %s2 = inlined_call_operand.vmem [shape: f32[1,240], index: 2, kind: input, shape index: {}]
  %s3 = inlined_call_operand.vmem [shape: f32[480,240], index: 3, kind: input, shape index: {}]
  %s4 = inlined_call_operand.vmem [shape: f32[2,480], index: 4, kind: input, shape index: {}]
  %s5 = inlined_call_operand.vmem [shape: bf16[240,256], index: 5, kind: input, shape index: {}]
  %s6 = inlined_call_operand.vmem [shape: f32[1,256], index: 6, kind: input, shape index: {}]
  %s7 = inlined_call_operand.vmem [shape: f32[1,256], index: 7, kind: input, shape index: {}]
  %s8 = inlined_call_operand.vmem [shape: f32[1,256], index: 8, kind: input, shape index: {}]
  %s9 = inlined_call_operand.vmem [shape: f32[2,2,256], index: 9, kind: output, shape index: {}]
  %s10 = sld [smem:[#allocation0]]
  $region69: #{forward.1} parent=0
    _
  %s12 = ssub.s32 1, %s10
  %s13 = scalar_select 0, %s12, %s10
  loop: start=0, step=1, limit=4
  $region2: #{forward.1} parent=0 // loop_pre_header
    _
  $region3: #{forward.1} parent=0 // loop_header
    %s15 = sphi 0, %s19
    %p16 = scmp.ge.s32.totalorder %s15, 4
    %s25 = sphi 0, %s27
    %s28 = sphi 0, %s25
    %s29 = sphi 0, %s28
    %s45 = sphi 0, %s29
    %s49 = sphi 0, %s49
    %s51 = sphi 0, %s49
    %s52 = sphi 0, %s51
    %s66 = sphi 0, %s52
    %s70 = sphi 0, %s70
    %s72 = sphi 0, %s70
    %s73 = sphi 0, %s72
    %s87 = sphi 0, %s73
    %s91 = sphi 0, %s91
    %s93 = sphi 0, %s91
    %s94 = sphi 0, %s93
    %s108 = sphi 0, %s94
    %s112 = sphi 0, %s112
    %s114 = sphi 0, %s112
    %s115 = sphi 0, %s114
    %s129 = sphi 0, %s115
    %s133 = sphi 0, %s133
    %s135 = sphi 0, %s133
    %s136 = sphi 0, %s135
    %s150 = sphi 0, %s136
    %s154 = sphi 0, %s154
    %s156 = sphi 0, %s154
    %s157 = sphi 0, %s156
    %s171 = sphi 0, %s157
    %s175 = sphi 0, %s175
    %s177 = sphi 0, %s175
    %s178 = sphi 0, %s177
    %s192 = sphi 0, %s178
    %s196 = sphi 0, %s196
    %s198 = sphi 0, %s196
    %s199 = sphi 0, %s198
    %s213 = sphi 0, %s199
    %s219 = sphi 0, %s221
    %s222 = sphi 0, %s219
    %s223 = sphi 0, %s222
    %s239 = sphi 0, %s223
  $region4: #{forward.1} parent=0 // loop_header_branch
    %18 = sbr.rel (%p16) target = $region8
  $region5: #{forward.1} parent=0 // loop_body
    %s20 = ssub.s32 %s15, 1
    %s21 = ssub.s32 %s15, 2
    %s22 = sadd.s32 %s15, 1
    %s23 = ssub.s32 %s15, %s22
    %p24 = scmp.eq.s32.totalorder %s23, 0
    %s26 = sadd.s32 %s25, 1
    %s27 = scalar_select %p24, %s25, %s26
    %p30 = pneg %p24
    %p31 = scmp.eq.s32.totalorder %s15, 1
    %p32 = por %p30, %p31
    %p33 = scmp.ne.s32.totalorder %s25, %s28
    %p34 = scmp.eq.s32.totalorder %s15, 0
    %p35 = por %p33, %p34
    %p36 = scmp.ne.s32.totalorder %s25, %s28
    %p37 = scmp.eq.s32.totalorder %s20, 1
    %p38 = por %p36, %p37
    %p39 = scmp.ne.s32.totalorder %s28, %s29
    %p40 = scmp.eq.s32.totalorder %s20, 0
    %p41 = por %p39, %p40
    %p42 = scmp.ne.s32.totalorder %s28, %s29
    %p43 = scmp.eq.s32.totalorder %s21, 1
    %p44 = por %p42, %p43
    %p46 = scmp.ne.s32.totalorder %s29, %s45
    %p47 = scmp.eq.s32.totalorder %s21, 0
    %p48 = por %p46, %p47
    %s50 = sadd.s32 %s49, 1
    %p53 = scmp.eq.s32.totalorder %s15, 1
    %p54 = scmp.ne.s32.totalorder %s49, %s51
    %p55 = scmp.eq.s32.totalorder %s15, 0
    %p56 = por %p54, %p55
    %p57 = scmp.ne.s32.totalorder %s49, %s51
    %p58 = scmp.eq.s32.totalorder %s20, 1
    %p59 = por %p57, %p58
    %p60 = scmp.ne.s32.totalorder %s51, %s52
    %p61 = scmp.eq.s32.totalorder %s20, 0
    %p62 = por %p60, %p61
    %p63 = scmp.ne.s32.totalorder %s51, %s52
    %p64 = scmp.eq.s32.totalorder %s21, 1
    %p65 = por %p63, %p64
    %p67 = scmp.ne.s32.totalorder %s52, %s66
    %p68 = scmp.eq.s32.totalorder %s21, 0
    %p69 = por %p67, %p68
    %s71 = sadd.s32 %s70, 1
    %p74 = scmp.eq.s32.totalorder %s15, 1
    %p75 = scmp.ne.s32.totalorder %s70, %s72
    %p76 = scmp.eq.s32.totalorder %s15, 0
    %p77 = por %p75, %p76
    %p78 = scmp.ne.s32.totalorder %s70, %s72
    %p79 = scmp.eq.s32.totalorder %s20, 1
    %p80 = por %p78, %p79
    %p81 = scmp.ne.s32.totalorder %s72, %s73
    %p82 = scmp.eq.s32.totalorder %s20, 0
    %p83 = por %p81, %p82
    %p84 = scmp.ne.s32.totalorder %s72, %s73
    %p85 = scmp.eq.s32.totalorder %s21, 1
    %p86 = por %p84, %p85
    %p88 = scmp.ne.s32.totalorder %s73, %s87
    %p89 = scmp.eq.s32.totalorder %s21, 0
    %p90 = por %p88, %p89
    %s92 = sadd.s32 %s91, 1
    %p95 = scmp.eq.s32.totalorder %s15, 1
    %p96 = scmp.ne.s32.totalorder %s91, %s93
    %p97 = scmp.eq.s32.totalorder %s15, 0
    %p98 = por %p96, %p97
    %p99 = scmp.ne.s32.totalorder %s91, %s93
    %p100 = scmp.eq.s32.totalorder %s20, 1
    %p101 = por %p99, %p100
    %p102 = scmp.ne.s32.totalorder %s93, %s94
    %p103 = scmp.eq.s32.totalorder %s20, 0
    %p104 = por %p102, %p103
    %p105 = scmp.ne.s32.totalorder %s93, %s94
    %p106 = scmp.eq.s32.totalorder %s21, 1
    %p107 = por %p105, %p106
    %p109 = scmp.ne.s32.totalorder %s94, %s108
    %p110 = scmp.eq.s32.totalorder %s21, 0
    %p111 = por %p109, %p110
    %s113 = sadd.s32 %s112, 1
    %p116 = scmp.eq.s32.totalorder %s15, 1
    %p117 = scmp.ne.s32.totalorder %s112, %s114
    %p118 = scmp.eq.s32.totalorder %s15, 0
    %p119 = por %p117, %p118
    %p120 = scmp.ne.s32.totalorder %s112, %s114
    %p121 = scmp.eq.s32.totalorder %s20, 1
    %p122 = por %p120, %p121
    %p123 = scmp.ne.s32.totalorder %s114, %s115
    %p124 = scmp.eq.s32.totalorder %s20, 0
    %p125 = por %p123, %p124
    %p126 = scmp.ne.s32.totalorder %s114, %s115
    %p127 = scmp.eq.s32.totalorder %s21, 1
    %p128 = por %p126, %p127
    %p130 = scmp.ne.s32.totalorder %s115, %s129
    %p131 = scmp.eq.s32.totalorder %s21, 0
    %p132 = por %p130, %p131
    %s134 = sadd.s32 %s133, 1
    %p137 = scmp.eq.s32.totalorder %s15, 1
    %p138 = scmp.ne.s32.totalorder %s133, %s135
    %p139 = scmp.eq.s32.totalorder %s15, 0
    %p140 = por %p138, %p139
    %p141 = scmp.ne.s32.totalorder %s133, %s135
    %p142 = scmp.eq.s32.totalorder %s20, 1
    %p143 = por %p141, %p142
    %p144 = scmp.ne.s32.totalorder %s135, %s136
    %p145 = scmp.eq.s32.totalorder %s20, 0
    %p146 = por %p144, %p145
    %p147 = scmp.ne.s32.totalorder %s135, %s136
    %p148 = scmp.eq.s32.totalorder %s21, 1
    %p149 = por %p147, %p148
    %p151 = scmp.ne.s32.totalorder %s136, %s150
    %p152 = scmp.eq.s32.totalorder %s21, 0
    %p153 = por %p151, %p152
    %s155 = sadd.s32 %s154, 1
    %p158 = scmp.eq.s32.totalorder %s15, 1
    %p159 = scmp.ne.s32.totalorder %s154, %s156
    %p160 = scmp.eq.s32.totalorder %s15, 0
    %p161 = por %p159, %p160
    %p162 = scmp.ne.s32.totalorder %s154, %s156
    %p163 = scmp.eq.s32.totalorder %s20, 1
    %p164 = por %p162, %p163
    %p165 = scmp.ne.s32.totalorder %s156, %s157
    %p166 = scmp.eq.s32.totalorder %s20, 0
    %p167 = por %p165, %p166
    %p168 = scmp.ne.s32.totalorder %s156, %s157
    %p169 = scmp.eq.s32.totalorder %s21, 1
    %p170 = por %p168, %p169
    %p172 = scmp.ne.s32.totalorder %s157, %s171
    %p173 = scmp.eq.s32.totalorder %s21, 0
    %p174 = por %p172, %p173
    %s176 = sadd.s32 %s175, 1
    %p179 = scmp.eq.s32.totalorder %s15, 1
    %p180 = scmp.ne.s32.totalorder %s175, %s177
    %p181 = scmp.eq.s32.totalorder %s15, 0
    %p182 = por %p180, %p181
    %p183 = scmp.ne.s32.totalorder %s175, %s177
    %p184 = scmp.eq.s32.totalorder %s20, 1
    %p185 = por %p183, %p184
    %p186 = scmp.ne.s32.totalorder %s177, %s178
    %p187 = scmp.eq.s32.totalorder %s20, 0
    %p188 = por %p186, %p187
    %p189 = scmp.ne.s32.totalorder %s177, %s178
    %p190 = scmp.eq.s32.totalorder %s21, 1
    %p191 = por %p189, %p190
    %p193 = scmp.ne.s32.totalorder %s178, %s192
    %p194 = scmp.eq.s32.totalorder %s21, 0
    %p195 = por %p193, %p194
    %s197 = sadd.s32 %s196, 1
    %p200 = scmp.eq.s32.totalorder %s15, 1
    %p201 = scmp.ne.s32.totalorder %s196, %s198
    %p202 = scmp.eq.s32.totalorder %s15, 0
    %p203 = por %p201, %p202
    %p204 = scmp.ne.s32.totalorder %s196, %s198
    %p205 = scmp.eq.s32.totalorder %s20, 1
    %p206 = por %p204, %p205
    %p207 = scmp.ne.s32.totalorder %s198, %s199
    %p208 = scmp.eq.s32.totalorder %s20, 0
    %p209 = por %p207, %p208
    %p210 = scmp.ne.s32.totalorder %s198, %s199
    %p211 = scmp.eq.s32.totalorder %s21, 1
    %p212 = por %p210, %p211
    %p214 = scmp.ne.s32.totalorder %s199, %s213
    %p215 = scmp.eq.s32.totalorder %s21, 0
    %p216 = por %p214, %p215
    %s217 = ssub.s32 %s15, %s22
    %p218 = scmp.eq.s32.totalorder %s217, 0
    %s220 = sadd.s32 %s219, 1
    %s221 = scalar_select %p218, %s219, %s220
    %p224 = pneg %p218
    %p225 = scmp.eq.s32.totalorder %s15, 1
    %p226 = por %p224, %p225
    %p227 = scmp.ne.s32.totalorder %s219, %s222
    %p228 = scmp.eq.s32.totalorder %s15, 0
    %p229 = por %p227, %p228
    %p230 = scmp.ne.s32.totalorder %s219, %s222
    %p231 = scmp.eq.s32.totalorder %s20, 1
    %p232 = por %p230, %p231
    %p233 = scmp.ne.s32.totalorder %s222, %s223
    %p234 = scmp.eq.s32.totalorder %s20, 0
    %p235 = por %p233, %p234
    %p236 = scmp.ne.s32.totalorder %s222, %s223
    %p237 = scmp.eq.s32.totalorder %s21, 1
    %p238 = por %p236, %p237
    %p240 = scmp.ne.s32.totalorder %s223, %s239
    %p241 = scmp.eq.s32.totalorder %s21, 0
    %p242 = por %p240, %p241
    %p243 = scmp.le.s32.totalorder 1, %s15
    %p244 = scmp.lt.s32.totalorder %s15, 3
    %p245 = pnand %p243, %p244
    %p246 = pneg %p245
    // Predicated region
    $region9: #{forward.1} parent=5 // pred_check
      _
    $region10: #{forward.1} parent=5 // pred_check_branch
      %248 = sbr.rel (%p245) target = $region12
    $region11: #{forward.1} parent=5 // pred_region
      %s249 = ssub.s32 %s15, 1
      // Predicated region
      $region13: #{forward.1} parent=11 // pred_check
        %p250 = pneg %p62
      $region14: #{forward.1} parent=11 // pred_check_branch
        %252 = sbr.rel (%p250) target = $region16
      $region15: #{forward.1} parent=11 // pred_region
        _
      $region16: #{forward.1} parent=11 // pred_fallthru
        _
      // Predicated region
      $region17: #{forward.1} parent=11 // pred_check
        %p253 = pneg %p83
      $region18: #{forward.1} parent=11 // pred_check_branch
        %255 = sbr.rel (%p253) target = $region20
      $region19: #{forward.1} parent=11 // pred_region
        _
      $region20: #{forward.1} parent=11 // pred_fallthru
        _
      // Predicated region
      $region21: #{forward.1} parent=11 // pred_check
        %p256 = pneg %p104
      $region22: #{forward.1} parent=11 // pred_check_branch
        %258 = sbr.rel (%p256) target = $region24
      $region23: #{forward.1} parent=11 // pred_region
        _
      $region24: #{forward.1} parent=11 // pred_fallthru
        _
      // Predicated region
      $region25: #{forward.1} parent=11 // pred_check
        %p259 = pneg %p125
      $region26: #{forward.1} parent=11 // pred_check_branch
        %261 = sbr.rel (%p259) target = $region28
      $region27: #{forward.1} parent=11 // pred_region
        _
      $region28: #{forward.1} parent=11 // pred_fallthru
        _
      // Predicated region
      $region29: #{forward.1} parent=11 // pred_check
        %p262 = pneg %p146
      $region30: #{forward.1} parent=11 // pred_check_branch
        %264 = sbr.rel (%p262) target = $region32
      $region31: #{forward.1} parent=11 // pred_region
        _
      $region32: #{forward.1} parent=11 // pred_fallthru
        _
      // Predicated region
      $region33: #{forward.1} parent=11 // pred_check
        %p265 = pneg %p167
      $region34: #{forward.1} parent=11 // pred_check_branch
        %267 = sbr.rel (%p265) target = $region36
      $region35: #{forward.1} parent=11 // pred_region
        _
      $region36: #{forward.1} parent=11 // pred_fallthru
        _
      // Predicated region
      $region37: #{forward.1} parent=11 // pred_check
        %p268 = pneg %p188
      $region38: #{forward.1} parent=11 // pred_check_branch
        %270 = sbr.rel (%p268) target = $region40
      $region39: #{forward.1} parent=11 // pred_region
        _
      $region40: #{forward.1} parent=11 // pred_fallthru
        _
      // Predicated region
      $region41: #{forward.1} parent=11 // pred_check
        %p271 = pneg %p209
      $region42: #{forward.1} parent=11 // pred_check_branch
        %273 = sbr.rel (%p271) target = $region44
      $region43: #{forward.1} parent=11 // pred_region
        _
      $region44: #{forward.1} parent=11 // pred_fallthru
        _
    $region12: #{forward.1} parent=5 // pred_fallthru
      _
    %p274 = scmp.lt.s32.totalorder %s15, 2
    // Predicated region
    $region45: #{forward.1} parent=5 // pred_check
      %p275 = pneg %p274
    $region46: #{forward.1} parent=5 // pred_check_branch
      %277 = sbr.rel (%p275) target = $region48
    $region47: #{forward.1} parent=5 // pred_region
      // Predicated region
      $region49: #{forward.1} parent=47 // pred_check
        %p278 = pneg %p35
      $region50: #{forward.1} parent=47 // pred_check_branch
        %280 = sbr.rel (%p278) target = $region52
      $region51: #{forward.1} parent=47 // pred_region
        %s281 = smul.u32 60, %s15
        %p282 = scmp.lt.s32.totalorder %s281, 119
        %s283 = scalar_select %p282, %s281, 119
        %s284 = smul.addr %s283, 4
        %s285 = scalar_lea.vmem %s0, %s284
        %s286 = smul.u32 60, %s15
      $region52: #{forward.1} parent=47 // pred_fallthru
        _
    $region48: #{forward.1} parent=5 // pred_fallthru
      _
    %p287 = scmp.le.s32.totalorder 1, %s15
    %p288 = scmp.lt.s32.totalorder %s15, 3
    %p289 = pnand %p287, %p288
    %p290 = pneg %p289
    // Predicated region
    $region53: #{forward.1} parent=5 // pred_check
      _
    $region54: #{forward.1} parent=5 // pred_check_branch
      %292 = sbr.rel (%p289) target = $region56
    $region55: #{forward.1} parent=5 // pred_region
      %s293 = ssub.s32 %s15, 1
      %s294 = smul.u32 60, %s20
      %p295 = scmp.lt.s32.totalorder %s294, 119
      %s296 = scalar_select %p295, %s294, 119
      %s297 = smul.addr %s296, 4
      %s298 = scalar_lea.vmem %s0, %s297
      %p299 = pneg %p41
      %p300 = pneg %p38
      %p301 = pneg %p62
      %p302 = pneg %p59
      %p303 = pneg %p83
      %p304 = pneg %p80
      %p305 = pneg %p104
      %p306 = pneg %p101
      %p307 = pneg %p125
      %p308 = pneg %p122
      %p309 = pneg %p146
      %p310 = pneg %p143
      %p311 = pneg %p167
      %p312 = pneg %p164
      %p313 = pneg %p188
      %p314 = pneg %p185
      %p315 = pneg %p209
      %p316 = pneg %p206
      %p317 = pneg %p235
      %p318 = pneg %p232
      %p319 = scmp.lt.s32.totalorder %s20, 1
      %s320 = scalar_select %p319, %s20, 1
      %s321 = smul.addr %s320, 2
      %s322 = smul.addr %s321, 2
      %s323 = scalar_lea.vmem %s9, %s322
      %s324 = smul.u32 60, %s20
      %p325 = scmp.lt.s32.totalorder %s324, 119
      %s326 = scalar_select %p325, %s324, 119
      %s327 = smul.addr %s326, 4
      %s328 = scalar_lea.vmem %s0, %s327
      %s329 = smul.u32 60, %s20
      %p330 = scmp.lt.s32.totalorder %s20, 1
      %s331 = scalar_select %p330, %s20, 1
      %s332 = smul.addr %s331, 2
      %s333 = smul.addr %s332, 2
      %s334 = scalar_lea.vmem %s9, %s333
      %v336 = vld [vmem:[%s328] sm:$0xf]
      %v337 = vld [vmem:[%s328 + $0x4] sm:$0xf]
      %v338 = vld [vmem:[%s328 + $0x8] sm:$0xf]
      %v339 = vld [vmem:[%s328 + $0xc] sm:$0xf]
      %v340 = vld [vmem:[%s328 + $0x10] sm:$0xf]
      %v341 = vld [vmem:[%s328 + $0x14] sm:$0xf]
      %v342 = vld [vmem:[%s328 + $0x18] sm:$0xf]
      %v343 = vld [vmem:[%s328 + $0x1c] sm:$0xf]
      %v344 = vld [vmem:[%s328 + $0x20] sm:$0xf]
      %v345 = vld [vmem:[%s328 + $0x24] sm:$0xf]
      %v346 = vld [vmem:[%s328 + $0x28] sm:$0xf]
      %v347 = vld [vmem:[%s328 + $0x2c] sm:$0xf]
      %v348 = vld [vmem:[%s328 + $0x30] sm:$0xf]
      %v349 = vld [vmem:[%s328 + $0x34] sm:$0xf]
      %v350 = vld [vmem:[%s328 + $0x38] sm:$0xf]
      %v351 = vld [vmem:[%s328 + $0x3c] sm:$0xf]
      %v352 = vld [vmem:[%s328 + $0x40] sm:$0xf]
      %v353 = vld [vmem:[%s328 + $0x44] sm:$0xf]
      %v354 = vld [vmem:[%s328 + $0x48] sm:$0xf]
      %v355 = vld [vmem:[%s328 + $0x4c] sm:$0xf]
      %v356 = vld [vmem:[%s328 + $0x50] sm:$0xf]
      %v357 = vld [vmem:[%s328 + $0x54] sm:$0xf]
      %v358 = vld [vmem:[%s328 + $0x58] sm:$0xf]
      %v359 = vld [vmem:[%s328 + $0x5c] sm:$0xf]
      %v360 = vld [vmem:[%s328 + $0x60] sm:$0xf]
      %v361 = vld [vmem:[%s328 + $0x64] sm:$0xf]
      %v362 = vld [vmem:[%s328 + $0x68] sm:$0xf]
      %v363 = vld [vmem:[%s328 + $0x6c] sm:$0xf]
      %v364 = vld [vmem:[%s328 + $0x70] sm:$0xf]
      %v365 = vld [vmem:[%s328 + $0x74] sm:$0xf]
      %v366 = vld [vmem:[%s328 + $0x78] sm:$0xf]
      %v367 = vld [vmem:[%s328 + $0x7c] sm:$0xf]
      %v368 = vld [vmem:[%s328 + $0x80] sm:$0xf]
      %v369 = vld [vmem:[%s328 + $0x84] sm:$0xf]
      %v370 = vld [vmem:[%s328 + $0x88] sm:$0xf]
      %v371 = vld [vmem:[%s328 + $0x8c] sm:$0xf]
      %v372 = vld [vmem:[%s328 + $0x90] sm:$0xf]
      %v373 = vld [vmem:[%s328 + $0x94] sm:$0xf]
      %v374 = vld [vmem:[%s328 + $0x98] sm:$0xf]
      %v375 = vld [vmem:[%s328 + $0x9c] sm:$0xf]
      %v376 = vld [vmem:[%s328 + $0xa0] sm:$0xf]
      %v377 = vld [vmem:[%s328 + $0xa4] sm:$0xf]
      %v378 = vld [vmem:[%s328 + $0xa8] sm:$0xf]
      %v379 = vld [vmem:[%s328 + $0xac] sm:$0xf]
      %v380 = vld [vmem:[%s328 + $0xb0] sm:$0xf]
      %v381 = vld [vmem:[%s328 + $0xb4] sm:$0xf]
      %v382 = vld [vmem:[%s328 + $0xb8] sm:$0xf]
      %v383 = vld [vmem:[%s328 + $0xbc] sm:$0xf]
      %v384 = vld [vmem:[%s328 + $0xc0] sm:$0xf]
      %v385 = vld [vmem:[%s328 + $0xc4] sm:$0xf]
      %v386 = vld [vmem:[%s328 + $0xc8] sm:$0xf]
      %v387 = vld [vmem:[%s328 + $0xcc] sm:$0xf]
      %v388 = vld [vmem:[%s328 + $0xd0] sm:$0xf]
      %v389 = vld [vmem:[%s328 + $0xd4] sm:$0xf]
      %v390 = vld [vmem:[%s328 + $0xd8] sm:$0xf]
      %v391 = vld [vmem:[%s328 + $0xdc] sm:$0xf]
      %v392 = vld [vmem:[%s328 + $0xe0] sm:$0xf]
      %v393 = vld [vmem:[%s328 + $0xe4] sm:$0xf]
      %v394 = vld [vmem:[%s328 + $0xe8] sm:$0xf]
      %v395 = vld [vmem:[%s328 + $0xec] sm:$0xf]
      %v396 = vld [vmem:[%s1] sm:$0xff]
      %v397 = vld [vmem:[%s1 + $0x8] sm:$0xff]
      %v398 = vld [vmem:[%s1 + $0x10] sm:$0xff]
      %v399 = vld [vmem:[%s1 + $0x18] sm:$0xff]
      %v400 = vld [vmem:[%s2] sm:$0x3]
      %v402 = vlaneseq
      %v403 = vshrl.u32 %v402, 7
      %v404 = vsub.s32 0, %v403
      %v405 = vrot.slane %v400, %v404
      %v406 = vlaneseq
      %v407 = vshrl.u32 %v406, 7
      %v408 = vsub.s32 1, %v407
      %v409 = vrot.slane %v400, %v408
      %v472 = vunpack.c.l.b16 %v336
      %v473 = vunpack.c.l.b16 %v337
      %v474 = vunpack.c.l.b16 %v338
      %v475 = vunpack.c.l.b16 %v339
      %v476 = vunpack.c.l.b16 %v340
      %v477 = vunpack.c.l.b16 %v341
      %v478 = vunpack.c.l.b16 %v342
      %v479 = vunpack.c.l.b16 %v343
      %v480 = vunpack.c.l.b16 %v344
      %v481 = vunpack.c.l.b16 %v345
      %v482 = vunpack.c.l.b16 %v346
      %v483 = vunpack.c.l.b16 %v347
      %v484 = vunpack.c.l.b16 %v348
      %v485 = vunpack.c.l.b16 %v349
      %v486 = vunpack.c.l.b16 %v350
      %v487 = vunpack.c.l.b16 %v351
      %v488 = vunpack.c.l.b16 %v352
      %v489 = vunpack.c.l.b16 %v353
      %v490 = vunpack.c.l.b16 %v354
      %v491 = vunpack.c.l.b16 %v355
      %v492 = vunpack.c.l.b16 %v356
      %v493 = vunpack.c.l.b16 %v357
      %v494 = vunpack.c.l.b16 %v358
      %v495 = vunpack.c.l.b16 %v359
      %v496 = vunpack.c.l.b16 %v360
      %v497 = vunpack.c.l.b16 %v361
      %v498 = vunpack.c.l.b16 %v362
      %v499 = vunpack.c.l.b16 %v363
      %v500 = vunpack.c.l.b16 %v364
      %v501 = vunpack.c.l.b16 %v365
      %v502 = vunpack.c.l.b16 %v366
      %v503 = vunpack.c.l.b16 %v367
      %v504 = vunpack.c.l.b16 %v368
      %v505 = vunpack.c.l.b16 %v369
      %v506 = vunpack.c.l.b16 %v370
      %v507 = vunpack.c.l.b16 %v371
      %v508 = vunpack.c.l.b16 %v372
      %v509 = vunpack.c.l.b16 %v373
      %v510 = vunpack.c.l.b16 %v374
      %v511 = vunpack.c.l.b16 %v375
      %v512 = vunpack.c.l.b16 %v376
      %v513 = vunpack.c.l.b16 %v377
      %v514 = vunpack.c.l.b16 %v378
      %v515 = vunpack.c.l.b16 %v379
      %v516 = vunpack.c.l.b16 %v380
      %v517 = vunpack.c.l.b16 %v381
      %v518 = vunpack.c.l.b16 %v382
      %v519 = vunpack.c.l.b16 %v383
      %v520 = vunpack.c.l.b16 %v384
      %v521 = vunpack.c.l.b16 %v385
      %v522 = vunpack.c.l.b16 %v386
      %v523 = vunpack.c.l.b16 %v387
      %v524 = vunpack.c.l.b16 %v388
      %v525 = vunpack.c.l.b16 %v389
      %v526 = vunpack.c.l.b16 %v390
      %v527 = vunpack.c.l.b16 %v391
      %v528 = vunpack.c.l.b16 %v392
      %v529 = vunpack.c.l.b16 %v393
      %v530 = vunpack.c.l.b16 %v394
      %v531 = vunpack.c.l.b16 %v395
      %v532 = vpack.c.b16 %v473, %v472
      %v533 = vpack.c.b16 %v475, %v474
      %v534 = vpack.c.b16 %v477, %v476
      %v535 = vpack.c.b16 %v479, %v478
      %v536 = vpack.c.b16 %v481, %v480
      %v537 = vpack.c.b16 %v483, %v482
      %v538 = vpack.c.b16 %v485, %v484
      %v539 = vpack.c.b16 %v487, %v486
      %v540 = vpack.c.b16 %v489, %v488
      %v541 = vpack.c.b16 %v491, %v490
      %v542 = vpack.c.b16 %v493, %v492
      %v543 = vpack.c.b16 %v495, %v494
      %v544 = vpack.c.b16 %v497, %v496
      %v545 = vpack.c.b16 %v499, %v498
      %v546 = vpack.c.b16 %v501, %v500
      %v547 = vpack.c.b16 %v503, %v502
      %v548 = vpack.c.b16 %v505, %v504
      %v549 = vpack.c.b16 %v507, %v506
      %v550 = vpack.c.b16 %v509, %v508
      %v551 = vpack.c.b16 %v511, %v510
      %v552 = vpack.c.b16 %v513, %v512
      %v553 = vpack.c.b16 %v515, %v514
      %v554 = vpack.c.b16 %v517, %v516
      %v555 = vpack.c.b16 %v519, %v518
      %v556 = vpack.c.b16 %v521, %v520
      %v557 = vpack.c.b16 %v523, %v522
      %v558 = vpack.c.b16 %v525, %v524
      %v559 = vpack.c.b16 %v527, %v526
      %v560 = vpack.c.b16 %v529, %v528
      %v561 = vpack.c.b16 %v531, %v530
      %v566 = vunpack.c.l.b16 %v396
      %v567 = vunpack.c.h.b16 %v396
      %v568 = vunpack.c.l.b16 %v397
      %v569 = vunpack.c.h.b16 %v397
      %v570 = vunpack.c.l.b16 %v398
      %v571 = vunpack.c.h.b16 %v398
      %v572 = vunpack.c.l.b16 %v399
      %v573 = vunpack.c.h.b16 %v399
      %v574 = vpack.c.b16 %v568, %v566
      %v575 = vpack.c.b16 %v569, %v567
      %v576 = vpack.c.b16 %v572, %v570
      %v577 = vpack.c.b16 %v573, %v571
      %vm582 = vcmask 261120
      %v584 = vsel %vm582, %v532, 0
      %v587 = vsel %vm582, %v533, 0
      %v590 = vsel %vm582, %v534, 0
      %v593 = vsel %vm582, %v535, 0
      %v596 = vsel %vm582, %v536, 0
      %v599 = vsel %vm582, %v537, 0
      %v602 = vsel %vm582, %v538, 0
      %v605 = vsel %vm582, %v539, 0
      %v608 = vsel %vm582, %v540, 0
      %v611 = vsel %vm582, %v541, 0
      %v614 = vsel %vm582, %v542, 0
      %v617 = vsel %vm582, %v543, 0
      %v620 = vsel %vm582, %v544, 0
      %v623 = vsel %vm582, %v545, 0
      %v626 = vsel %vm582, %v546, 0
      %v629 = vsel %vm582, %v547, 0
      %v632 = vsel %vm582, %v548, 0
      %v635 = vsel %vm582, %v549, 0
      %v638 = vsel %vm582, %v550, 0
      %v641 = vsel %vm582, %v551, 0
      %v644 = vsel %vm582, %v552, 0
      %v647 = vsel %vm582, %v553, 0
      %v650 = vsel %vm582, %v554, 0
      %v653 = vsel %vm582, %v555, 0
      %v656 = vsel %vm582, %v556, 0
      %v659 = vsel %vm582, %v557, 0
      %v662 = vsel %vm582, %v558, 0
      %v665 = vsel %vm582, %v559, 0
      %v668 = vsel %vm582, %v560, 0
      %v671 = vsel %vm582, %v561, 0
      %673 = vmatprep.subr.bf16.mxu0 0
      %674 = vmatpush1.bf16.msra.mxu0 0
      %675 = vmatprep.subr.bf16.mxu0 0
      %676 = vmatpush1.bf16.msra.mxu0 0
      %677 = vmatprep.subr.bf16.mxu0 0
      %678 = vmatpush1.bf16.msra.mxu0 0
      %679 = vmatprep.subr.bf16.mxu0 0
      %680 = vmatpush1.bf16.msra.mxu0 0
      %681 = vmatprep.subr.bf16.mxu0 0
      %682 = vmatpush1.bf16.msra.mxu0 0
      %683 = vmatprep.subr.bf16.mxu0 0
      %684 = vmatpush1.bf16.msra.mxu0 0
      %685 = vmatprep.subr.bf16.mxu0 %v577
      %686 = vmatpush1.bf16.msra.mxu0 %v576
      %687 = vmatprep.subr.bf16.mxu0 %v575
      %688 = vmatpush1.bf16.msra.mxu0 %v574
      %689 = vmatprep.subr.bf16.mxu0 0
      %690 = vmatpush2.bf16.msra.mxu0 0
      %691 = vmatprep.subr.bf16.mxu0 0
      %692 = vmatpush2.bf16.msra.mxu0 0
      %693 = vmatprep.subr.bf16.mxu0 0
      %694 = vmatpush2.bf16.msra.mxu0 0
      %695 = vmatprep.subr.bf16.mxu0 0
      %696 = vmatpush2.bf16.msra.mxu0 0
      %697 = vmatprep.subr.bf16.mxu0 0
      %698 = vmatpush2.bf16.msra.mxu0 0
      %699 = vmatprep.subr.bf16.mxu0 0
      %700 = vmatpush2.bf16.msra.mxu0 0
      %701 = vmatprep.subr.bf16.mxu0 0
      %702 = vmatpush2.bf16.msra.mxu0 0
      %703 = vmatprep.subr.bf16.mxu0 0
      %704 = vmatpush2.bf16.msra.mxu0 0
      %705 = vmatprep.mubr.bf16.mxu0 0
      %706 = vmatmul.mubr.bf16.gmra.mxu0 %v584
      %v707 = vpop.f32.mrf.mxu0
      %v708 = vadd.f32 %v405, %v707
      %v709 = vpop.f32.mrf.mxu0
      %v710 = vadd.f32 %v409, %v709
      %v711 = vpop.f32.mrf.mxu0
      %v712 = vadd.f32 %v405, %v711
      %v713 = vpop.f32.mrf.mxu0
      %v714 = vadd.f32 %v409, %v713
      %715 = vmatprep.mubr.bf16.mxu0 0
      %716 = vmatmul.mubr.bf16.gmra.mxu0 %v587
      %v717 = vpop.f32.mrf.mxu0
      %v718 = vadd.f32 %v405, %v717
      %v719 = vpop.f32.mrf.mxu0
      %v720 = vadd.f32 %v409, %v719
      %v721 = vpop.f32.mrf.mxu0
      %v722 = vadd.f32 %v405, %v721
      %v723 = vpop.f32.mrf.mxu0
      %v724 = vadd.f32 %v409, %v723
      %725 = vmatprep.mubr.bf16.mxu0 0
      %726 = vmatmul.mubr.bf16.gmra.mxu0 %v590
      %v727 = vpop.f32.mrf.mxu0
      %v728 = vadd.f32 %v405, %v727
      %v729 = vpop.f32.mrf.mxu0
      %v730 = vadd.f32 %v409, %v729
      %v731 = vpop.f32.mrf.mxu0
      %v732 = vadd.f32 %v405, %v731
      %v733 = vpop.f32.mrf.mxu0
      %v734 = vadd.f32 %v409, %v733
      %735 = vmatprep.mubr.bf16.mxu0 0
      %736 = vmatmul.mubr.bf16.gmra.mxu0 %v593
      %v737 = vpop.f32.mrf.mxu0
      %v738 = vadd.f32 %v405, %v737
      %v739 = vpop.f32.mrf.mxu0
      %v740 = vadd.f32 %v409, %v739
      %v741 = vpop.f32.mrf.mxu0
      %v742 = vadd.f32 %v405, %v741
      %v743 = vpop.f32.mrf.mxu0
      %v744 = vadd.f32 %v409, %v743
      %745 = vmatprep.mubr.bf16.mxu0 0
      %746 = vmatmul.mubr.bf16.gmra.mxu0 %v596
      %v747 = vpop.f32.mrf.mxu0
      %v748 = vadd.f32 %v405, %v747
      %v749 = vpop.f32.mrf.mxu0
      %v750 = vadd.f32 %v409, %v749
      %v751 = vpop.f32.mrf.mxu0
      %v752 = vadd.f32 %v405, %v751
      %v753 = vpop.f32.mrf.mxu0
      %v754 = vadd.f32 %v409, %v753
      %755 = vmatprep.mubr.bf16.mxu0 0
      %756 = vmatmul.mubr.bf16.gmra.mxu0 %v599
      %v757 = vpop.f32.mrf.mxu0
      %v758 = vadd.f32 %v405, %v757
      %v759 = vpop.f32.mrf.mxu0
      %v760 = vadd.f32 %v409, %v759
      %v761 = vpop.f32.mrf.mxu0
      %v762 = vadd.f32 %v405, %v761
      %v763 = vpop.f32.mrf.mxu0
      %v764 = vadd.f32 %v409, %v763
      %765 = vmatprep.mubr.bf16.mxu0 0
      %766 = vmatmul.mubr.bf16.gmra.mxu0 %v602
      %v767 = vpop.f32.mrf.mxu0
      %v768 = vadd.f32 %v405, %v767
      %v769 = vpop.f32.mrf.mxu0
      %v770 = vadd.f32 %v409, %v769
      %v771 = vpop.f32.mrf.mxu0
      %v772 = vadd.f32 %v405, %v771
      %v773 = vpop.f32.mrf.mxu0
      %v774 = vadd.f32 %v409, %v773
      %775 = vmatprep.mubr.bf16.mxu0 0
      %776 = vmatmul.mubr.bf16.gmra.mxu0 %v605
      %v777 = vpop.f32.mrf.mxu0
      %v778 = vadd.f32 %v405, %v777
      %v779 = vpop.f32.mrf.mxu0
      %v780 = vadd.f32 %v409, %v779
      %v781 = vpop.f32.mrf.mxu0
      %v782 = vadd.f32 %v405, %v781
      %v783 = vpop.f32.mrf.mxu0
      %v784 = vadd.f32 %v409, %v783
      %785 = vmatprep.mubr.bf16.mxu0 0
      %786 = vmatmul.mubr.bf16.gmra.mxu0 %v608
      %v787 = vpop.f32.mrf.mxu0
      %v788 = vadd.f32 %v405, %v787
      %v789 = vpop.f32.mrf.mxu0
      %v790 = vadd.f32 %v409, %v789
      %v791 = vpop.f32.mrf.mxu0
      %v792 = vadd.f32 %v405, %v791
      %v793 = vpop.f32.mrf.mxu0
      %v794 = vadd.f32 %v409, %v793
      %795 = vmatprep.mubr.bf16.mxu0 0
      %796 = vmatmul.mubr.bf16.gmra.mxu0 %v611
      %v797 = vpop.f32.mrf.mxu0
      %v798 = vadd.f32 %v405, %v797
      %v799 = vpop.f32.mrf.mxu0
      %v800 = vadd.f32 %v409, %v799
      %v801 = vpop.f32.mrf.mxu0
      %v802 = vadd.f32 %v405, %v801
      %v803 = vpop.f32.mrf.mxu0
      %v804 = vadd.f32 %v409, %v803
      %805 = vmatprep.mubr.bf16.mxu0 0
      %806 = vmatmul.mubr.bf16.gmra.mxu0 %v614
      %v807 = vpop.f32.mrf.mxu0
      %v808 = vadd.f32 %v405, %v807
      %v809 = vpop.f32.mrf.mxu0
      %v810 = vadd.f32 %v409, %v809
      %v811 = vpop.f32.mrf.mxu0
      %v812 = vadd.f32 %v405, %v811
      %v813 = vpop.f32.mrf.mxu0
      %v814 = vadd.f32 %v409, %v813
      %815 = vmatprep.mubr.bf16.mxu0 0
      %816 = vmatmul.mubr.bf16.gmra.mxu0 %v617
      %v817 = vpop.f32.mrf.mxu0
      %v818 = vadd.f32 %v405, %v817
      %v819 = vpop.f32.mrf.mxu0
      %v820 = vadd.f32 %v409, %v819
      %v821 = vpop.f32.mrf.mxu0
      %v822 = vadd.f32 %v405, %v821
      %v823 = vpop.f32.mrf.mxu0
      %v824 = vadd.f32 %v409, %v823
      %825 = vmatprep.mubr.bf16.mxu0 0
      %826 = vmatmul.mubr.bf16.gmra.mxu0 %v620
      %v827 = vpop.f32.mrf.mxu0
      %v828 = vadd.f32 %v405, %v827
      %v829 = vpop.f32.mrf.mxu0
      %v830 = vadd.f32 %v409, %v829
      %v831 = vpop.f32.mrf.mxu0
      %v832 = vadd.f32 %v405, %v831
      %v833 = vpop.f32.mrf.mxu0
      %v834 = vadd.f32 %v409, %v833
      %835 = vmatprep.mubr.bf16.mxu0 0
      %836 = vmatmul.mubr.bf16.gmra.mxu0 %v623
      %v837 = vpop.f32.mrf.mxu0
      %v838 = vadd.f32 %v405, %v837
      %v839 = vpop.f32.mrf.mxu0
      %v840 = vadd.f32 %v409, %v839
      %v841 = vpop.f32.mrf.mxu0
      %v842 = vadd.f32 %v405, %v841
      %v843 = vpop.f32.mrf.mxu0
      %v844 = vadd.f32 %v409, %v843
      %845 = vmatprep.mubr.bf16.mxu0 0
      %846 = vmatmul.mubr.bf16.gmra.mxu0 %v626
      %v847 = vpop.f32.mrf.mxu0
      %v848 = vadd.f32 %v405, %v847
      %v849 = vpop.f32.mrf.mxu0
      %v850 = vadd.f32 %v409, %v849
      %v851 = vpop.f32.mrf.mxu0
      %v852 = vadd.f32 %v405, %v851
      %v853 = vpop.f32.mrf.mxu0
      %v854 = vadd.f32 %v409, %v853
      %855 = vmatprep.mubr.bf16.mxu0 0
      %856 = vmatmul.mubr.bf16.gmra.mxu0 %v629
      %v857 = vpop.f32.mrf.mxu0
      %v858 = vadd.f32 %v405, %v857
      %v859 = vpop.f32.mrf.mxu0
      %v860 = vadd.f32 %v409, %v859
      %v861 = vpop.f32.mrf.mxu0
      %v862 = vadd.f32 %v405, %v861
      %v863 = vpop.f32.mrf.mxu0
      %v864 = vadd.f32 %v409, %v863
      %865 = vmatprep.mubr.bf16.mxu0 0
      %866 = vmatmul.mubr.bf16.gmra.mxu0 %v632
      %v867 = vpop.f32.mrf.mxu0
      %v868 = vadd.f32 %v405, %v867
      %v869 = vpop.f32.mrf.mxu0
      %v870 = vadd.f32 %v409, %v869
      %v871 = vpop.f32.mrf.mxu0
      %v872 = vadd.f32 %v405, %v871
      %v873 = vpop.f32.mrf.mxu0
      %v874 = vadd.f32 %v409, %v873
      %875 = vmatprep.mubr.bf16.mxu0 0
      %876 = vmatmul.mubr.bf16.gmra.mxu0 %v635
      %v877 = vpop.f32.mrf.mxu0
      %v878 = vadd.f32 %v405, %v877
      %v879 = vpop.f32.mrf.mxu0
      %v880 = vadd.f32 %v409, %v879
      %v881 = vpop.f32.mrf.mxu0
      %v882 = vadd.f32 %v405, %v881
      %v883 = vpop.f32.mrf.mxu0
      %v884 = vadd.f32 %v409, %v883
      %885 = vmatprep.mubr.bf16.mxu0 0
      %886 = vmatmul.mubr.bf16.gmra.mxu0 %v638
      %v887 = vpop.f32.mrf.mxu0
      %v888 = vadd.f32 %v405, %v887
      %v889 = vpop.f32.mrf.mxu0
      %v890 = vadd.f32 %v409, %v889
      %v891 = vpop.f32.mrf.mxu0
      %v892 = vadd.f32 %v405, %v891
      %v893 = vpop.f32.mrf.mxu0
      %v894 = vadd.f32 %v409, %v893
      %895 = vmatprep.mubr.bf16.mxu0 0
      %896 = vmatmul.mubr.bf16.gmra.mxu0 %v641
      %v897 = vpop.f32.mrf.mxu0
      %v898 = vadd.f32 %v405, %v897
      %v899 = vpop.f32.mrf.mxu0
      %v900 = vadd.f32 %v409, %v899
      %v901 = vpop.f32.mrf.mxu0
      %v902 = vadd.f32 %v405, %v901
      %v903 = vpop.f32.mrf.mxu0
      %v904 = vadd.f32 %v409, %v903
      %905 = vmatprep.mubr.bf16.mxu0 0
      %906 = vmatmul.mubr.bf16.gmra.mxu0 %v644
      %v907 = vpop.f32.mrf.mxu0
      %v908 = vadd.f32 %v405, %v907
      %v909 = vpop.f32.mrf.mxu0
      %v910 = vadd.f32 %v409, %v909
      %v911 = vpop.f32.mrf.mxu0
      %v912 = vadd.f32 %v405, %v911
      %v913 = vpop.f32.mrf.mxu0
      %v914 = vadd.f32 %v409, %v913
      %915 = vmatprep.mubr.bf16.mxu0 0
      %916 = vmatmul.mubr.bf16.gmra.mxu0 %v647
      %v917 = vpop.f32.mrf.mxu0
      %v918 = vadd.f32 %v405, %v917
      %v919 = vpop.f32.mrf.mxu0
      %v920 = vadd.f32 %v409, %v919
      %v921 = vpop.f32.mrf.mxu0
      %v922 = vadd.f32 %v405, %v921
      %v923 = vpop.f32.mrf.mxu0
      %v924 = vadd.f32 %v409, %v923
      %925 = vmatprep.mubr.bf16.mxu0 0
      %926 = vmatmul.mubr.bf16.gmra.mxu0 %v650
      %v927 = vpop.f32.mrf.mxu0
      %v928 = vadd.f32 %v405, %v927
      %v929 = vpop.f32.mrf.mxu0
      %v930 = vadd.f32 %v409, %v929
      %v931 = vpop.f32.mrf.mxu0
      %v932 = vadd.f32 %v405, %v931
      %v933 = vpop.f32.mrf.mxu0
      %v934 = vadd.f32 %v409, %v933
      %935 = vmatprep.mubr.bf16.mxu0 0
      %936 = vmatmul.mubr.bf16.gmra.mxu0 %v653
      %v937 = vpop.f32.mrf.mxu0
      %v938 = vadd.f32 %v405, %v937
      %v939 = vpop.f32.mrf.mxu0
      %v940 = vadd.f32 %v409, %v939
      %v941 = vpop.f32.mrf.mxu0
      %v942 = vadd.f32 %v405, %v941
      %v943 = vpop.f32.mrf.mxu0
      %v944 = vadd.f32 %v409, %v943
      %945 = vmatprep.mubr.bf16.mxu0 0
      %946 = vmatmul.mubr.bf16.gmra.mxu0 %v656
      %v947 = vpop.f32.mrf.mxu0
      %v948 = vadd.f32 %v405, %v947
      %v949 = vpop.f32.mrf.mxu0
      %v950 = vadd.f32 %v409, %v949
      %v951 = vpop.f32.mrf.mxu0
      %v952 = vadd.f32 %v405, %v951
      %v953 = vpop.f32.mrf.mxu0
      %v954 = vadd.f32 %v409, %v953
      %955 = vmatprep.mubr.bf16.mxu0 0
      %956 = vmatmul.mubr.bf16.gmra.mxu0 %v659
      %v957 = vpop.f32.mrf.mxu0
      %v958 = vadd.f32 %v405, %v957
      %v959 = vpop.f32.mrf.mxu0
      %v960 = vadd.f32 %v409, %v959
      %v961 = vpop.f32.mrf.mxu0
      %v962 = vadd.f32 %v405, %v961
      %v963 = vpop.f32.mrf.mxu0
      %v964 = vadd.f32 %v409, %v963
      %965 = vmatprep.mubr.bf16.mxu0 0
      %966 = vmatmul.mubr.bf16.gmra.mxu0 %v662
      %v967 = vpop.f32.mrf.mxu0
      %v968 = vadd.f32 %v405, %v967
      %v969 = vpop.f32.mrf.mxu0
      %v970 = vadd.f32 %v409, %v969
      %v971 = vpop.f32.mrf.mxu0
      %v972 = vadd.f32 %v405, %v971
      %v973 = vpop.f32.mrf.mxu0
      %v974 = vadd.f32 %v409, %v973
      %975 = vmatprep.mubr.bf16.mxu0 0
      %976 = vmatmul.mubr.bf16.gmra.mxu0 %v665
      %v977 = vpop.f32.mrf.mxu0
      %v978 = vadd.f32 %v405, %v977
      %v979 = vpop.f32.mrf.mxu0
      %v980 = vadd.f32 %v409, %v979
      %v981 = vpop.f32.mrf.mxu0
      %v982 = vadd.f32 %v405, %v981
      %v983 = vpop.f32.mrf.mxu0
      %v984 = vadd.f32 %v409, %v983
      %985 = vmatprep.mubr.bf16.mxu0 0
      %986 = vmatmul.mubr.bf16.gmra.mxu0 %v668
      %v987 = vpop.f32.mrf.mxu0
      %v988 = vadd.f32 %v405, %v987
      %v989 = vpop.f32.mrf.mxu0
      %v990 = vadd.f32 %v409, %v989
      %v991 = vpop.f32.mrf.mxu0
      %v992 = vadd.f32 %v405, %v991
      %v993 = vpop.f32.mrf.mxu0
      %v994 = vadd.f32 %v409, %v993
      %995 = vmatprep.mubr.bf16.mxu0 0
      %996 = vmatmul.mubr.bf16.gmra.mxu0 %v671
      %v997 = vpop.f32.mrf.mxu0
      %v998 = vadd.f32 %v405, %v997
      %v999 = vpop.f32.mrf.mxu0
      %v1000 = vadd.f32 %v409, %v999
      %v1001 = vpop.f32.mrf.mxu0
      %v1002 = vadd.f32 %v405, %v1001
      %v1003 = vpop.f32.mrf.mxu0
      %v1004 = vadd.f32 %v409, %v1003
      %1005 = vdwg.mxu0
      %v1006 = vmax.f32 %v708, 0.0
      %v1007 = vmax.f32 %v710, 0.0
      %v1008 = vmax.f32 %v712, 0.0
      %v1009 = vmax.f32 %v714, 0.0
      %v1010 = vmax.f32 %v718, 0.0
      %v1011 = vmax.f32 %v720, 0.0
      %v1012 = vmax.f32 %v722, 0.0
      %v1013 = vmax.f32 %v724, 0.0
      %v1014 = vmax.f32 %v728, 0.0
      %v1015 = vmax.f32 %v730, 0.0
      %v1016 = vmax.f32 %v732, 0.0
      %v1017 = vmax.f32 %v734, 0.0
      %v1018 = vmax.f32 %v738, 0.0
      %v1019 = vmax.f32 %v740, 0.0
      %v1020 = vmax.f32 %v742, 0.0
      %v1021 = vmax.f32 %v744, 0.0
      %v1022 = vmax.f32 %v748, 0.0
      %v1023 = vmax.f32 %v750, 0.0
      %v1024 = vmax.f32 %v752, 0.0
      %v1025 = vmax.f32 %v754, 0.0
      %v1026 = vmax.f32 %v758, 0.0
      %v1027 = vmax.f32 %v760, 0.0
      %v1028 = vmax.f32 %v762, 0.0
      %v1029 = vmax.f32 %v764, 0.0
      %v1030 = vmax.f32 %v768, 0.0
      %v1031 = vmax.f32 %v770, 0.0
      %v1032 = vmax.f32 %v772, 0.0
      %v1033 = vmax.f32 %v774, 0.0
      %v1034 = vmax.f32 %v778, 0.0
      %v1035 = vmax.f32 %v780, 0.0
      %v1036 = vmax.f32 %v782, 0.0
      %v1037 = vmax.f32 %v784, 0.0
      %v1038 = vmax.f32 %v788, 0.0
      %v1039 = vmax.f32 %v790, 0.0
      %v1040 = vmax.f32 %v792, 0.0
      %v1041 = vmax.f32 %v794, 0.0
      %v1042 = vmax.f32 %v798, 0.0
      %v1043 = vmax.f32 %v800, 0.0
      %v1044 = vmax.f32 %v802, 0.0
      %v1045 = vmax.f32 %v804, 0.0
      %v1046 = vmax.f32 %v808, 0.0
      %v1047 = vmax.f32 %v810, 0.0
      %v1048 = vmax.f32 %v812, 0.0
      %v1049 = vmax.f32 %v814, 0.0
      %v1050 = vmax.f32 %v818, 0.0
      %v1051 = vmax.f32 %v820, 0.0
      %v1052 = vmax.f32 %v822, 0.0
      %v1053 = vmax.f32 %v824, 0.0
      %v1054 = vmax.f32 %v828, 0.0
      %v1055 = vmax.f32 %v830, 0.0
      %v1056 = vmax.f32 %v832, 0.0
      %v1057 = vmax.f32 %v834, 0.0
      %v1058 = vmax.f32 %v838, 0.0
      %v1059 = vmax.f32 %v840, 0.0
      %v1060 = vmax.f32 %v842, 0.0
      %v1061 = vmax.f32 %v844, 0.0
      %v1062 = vmax.f32 %v848, 0.0
      %v1063 = vmax.f32 %v850, 0.0
      %v1064 = vmax.f32 %v852, 0.0
      %v1065 = vmax.f32 %v854, 0.0
      %v1066 = vmax.f32 %v858, 0.0
      %v1067 = vmax.f32 %v860, 0.0
      %v1068 = vmax.f32 %v862, 0.0
      %v1069 = vmax.f32 %v864, 0.0
      %v1070 = vmax.f32 %v868, 0.0
      %v1071 = vmax.f32 %v870, 0.0
      %v1072 = vmax.f32 %v872, 0.0
      %v1073 = vmax.f32 %v874, 0.0
      %v1074 = vmax.f32 %v878, 0.0
      %v1075 = vmax.f32 %v880, 0.0
      %v1076 = vmax.f32 %v882, 0.0
      %v1077 = vmax.f32 %v884, 0.0
      %v1078 = vmax.f32 %v888, 0.0
      %v1079 = vmax.f32 %v890, 0.0
      %v1080 = vmax.f32 %v892, 0.0
      %v1081 = vmax.f32 %v894, 0.0
      %v1082 = vmax.f32 %v898, 0.0
      %v1083 = vmax.f32 %v900, 0.0
      %v1084 = vmax.f32 %v902, 0.0
      %v1085 = vmax.f32 %v904, 0.0
      %v1086 = vmax.f32 %v908, 0.0
      %v1087 = vmax.f32 %v910, 0.0
      %v1088 = vmax.f32 %v912, 0.0
      %v1089 = vmax.f32 %v914, 0.0
      %v1090 = vmax.f32 %v918, 0.0
      %v1091 = vmax.f32 %v920, 0.0
      %v1092 = vmax.f32 %v922, 0.0
      %v1093 = vmax.f32 %v924, 0.0
      %v1094 = vmax.f32 %v928, 0.0
      %v1095 = vmax.f32 %v930, 0.0
      %v1096 = vmax.f32 %v932, 0.0
      %v1097 = vmax.f32 %v934, 0.0
      %v1098 = vmax.f32 %v938, 0.0
      %v1099 = vmax.f32 %v940, 0.0
      %v1100 = vmax.f32 %v942, 0.0
      %v1101 = vmax.f32 %v944, 0.0
      %v1102 = vmax.f32 %v948, 0.0
      %v1103 = vmax.f32 %v950, 0.0
      %v1104 = vmax.f32 %v952, 0.0
      %v1105 = vmax.f32 %v954, 0.0
      %v1106 = vmax.f32 %v958, 0.0
      %v1107 = vmax.f32 %v960, 0.0
      %v1108 = vmax.f32 %v962, 0.0
      %v1109 = vmax.f32 %v964, 0.0
      %v1110 = vmax.f32 %v968, 0.0
      %v1111 = vmax.f32 %v970, 0.0
      %v1112 = vmax.f32 %v972, 0.0
      %v1113 = vmax.f32 %v974, 0.0
      %v1114 = vmax.f32 %v978, 0.0
      %v1115 = vmax.f32 %v980, 0.0
      %v1116 = vmax.f32 %v982, 0.0
      %v1117 = vmax.f32 %v984, 0.0
      %v1118 = vmax.f32 %v988, 0.0
      %v1119 = vmax.f32 %v990, 0.0
      %v1120 = vmax.f32 %v992, 0.0
      %v1121 = vmax.f32 %v994, 0.0
      %v1122 = vmax.f32 %v998, 0.0
      %v1123 = vmax.f32 %v1000, 0.0
      %v1124 = vmax.f32 %v1002, 0.0
      %v1125 = vmax.f32 %v1004, 0.0
      %v1126 = vld [vmem:[%s3] sm:$0xff]
      %v1127 = vld [vmem:[%s3 + $0x8] sm:$0xff]
      %v1128 = vld [vmem:[%s3 + $0x10] sm:$0xff]
      %v1129 = vld [vmem:[%s3 + $0x18] sm:$0xff]
      %v1130 = vld [vmem:[%s3 + $0x20] sm:$0xff]
      %v1131 = vld [vmem:[%s3 + $0x28] sm:$0xff]
      %v1132 = vld [vmem:[%s3 + $0x30] sm:$0xff]
      %v1133 = vld [vmem:[%s3 + $0x38] sm:$0xff]
      %v1134 = vld [vmem:[%s3 + $0x40] sm:$0xff]
      %v1135 = vld [vmem:[%s3 + $0x48] sm:$0xff]
      %v1136 = vld [vmem:[%s3 + $0x50] sm:$0xff]
      %v1137 = vld [vmem:[%s3 + $0x58] sm:$0xff]
      %v1138 = vld [vmem:[%s3 + $0x60] sm:$0xff]
      %v1139 = vld [vmem:[%s3 + $0x68] sm:$0xff]
      %v1140 = vld [vmem:[%s3 + $0x70] sm:$0xff]
      %v1141 = vld [vmem:[%s3 + $0x78] sm:$0xff]
      %v1142 = vld [vmem:[%s3 + $0x80] sm:$0xff]
      %v1143 = vld [vmem:[%s3 + $0x88] sm:$0xff]
      %v1144 = vld [vmem:[%s3 + $0x90] sm:$0xff]
      %v1145 = vld [vmem:[%s3 + $0x98] sm:$0xff]
      %v1146 = vld [vmem:[%s3 + $0xa0] sm:$0xff]
      %v1147 = vld [vmem:[%s3 + $0xa8] sm:$0xff]
      %v1148 = vld [vmem:[%s3 + $0xb0] sm:$0xff]
      %v1149 = vld [vmem:[%s3 + $0xb8] sm:$0xff]
      %v1150 = vld [vmem:[%s3 + $0xc0] sm:$0xff]
      %v1151 = vld [vmem:[%s3 + $0xc8] sm:$0xff]
      %v1152 = vld [vmem:[%s3 + $0xd0] sm:$0xff]
      %v1153 = vld [vmem:[%s3 + $0xd8] sm:$0xff]
      %v1154 = vld [vmem:[%s3 + $0xe0] sm:$0xff]
      %v1155 = vld [vmem:[%s3 + $0xe8] sm:$0xff]
      %v1156 = vld [vmem:[%s3 + $0xf0] sm:$0xff]
      %v1157 = vld [vmem:[%s3 + $0xf8] sm:$0xff]
      %v1158 = vld [vmem:[%s3 + $0x100] sm:$0xff]
      %v1159 = vld [vmem:[%s3 + $0x108] sm:$0xff]
      %v1160 = vld [vmem:[%s3 + $0x110] sm:$0xff]
      %v1161 = vld [vmem:[%s3 + $0x118] sm:$0xff]
      %v1162 = vld [vmem:[%s3 + $0x120] sm:$0xff]
      %v1163 = vld [vmem:[%s3 + $0x128] sm:$0xff]
      %v1164 = vld [vmem:[%s3 + $0x130] sm:$0xff]
      %v1165 = vld [vmem:[%s3 + $0x138] sm:$0xff]
      %v1166 = vld [vmem:[%s3 + $0x140] sm:$0xff]
      %v1167 = vld [vmem:[%s3 + $0x148] sm:$0xff]
      %v1168 = vld [vmem:[%s3 + $0x150] sm:$0xff]
      %v1169 = vld [vmem:[%s3 + $0x158] sm:$0xff]
      %v1170 = vld [vmem:[%s3 + $0x160] sm:$0xff]
      %v1171 = vld [vmem:[%s3 + $0x168] sm:$0xff]
      %v1172 = vld [vmem:[%s3 + $0x170] sm:$0xff]
      %v1173 = vld [vmem:[%s3 + $0x178] sm:$0xff]
      %v1174 = vld [vmem:[%s3 + $0x180] sm:$0xff]
      %v1175 = vld [vmem:[%s3 + $0x188] sm:$0xff]
      %v1176 = vld [vmem:[%s3 + $0x190] sm:$0xff]
      %v1177 = vld [vmem:[%s3 + $0x198] sm:$0xff]
      %v1178 = vld [vmem:[%s3 + $0x1a0] sm:$0xff]
      %v1179 = vld [vmem:[%s3 + $0x1a8] sm:$0xff]
      %v1180 = vld [vmem:[%s3 + $0x1b0] sm:$0xff]
      %v1181 = vld [vmem:[%s3 + $0x1b8] sm:$0xff]
      %v1182 = vld [vmem:[%s3 + $0x1c0] sm:$0xff]
      %v1183 = vld [vmem:[%s3 + $0x1c8] sm:$0xff]
      %v1184 = vld [vmem:[%s3 + $0x1d0] sm:$0xff]
      %v1185 = vld [vmem:[%s3 + $0x1d8] sm:$0xff]
      %v1186 = vld [vmem:[%s3 + $0x1e0] sm:$0xff]
      %v1187 = vld [vmem:[%s3 + $0x1e8] sm:$0xff]
      %v1188 = vld [vmem:[%s3 + $0x1f0] sm:$0xff]
      %v1189 = vld [vmem:[%s3 + $0x1f8] sm:$0xff]
      %v1190 = vld [vmem:[%s3 + $0x200] sm:$0xff]
      %v1191 = vld [vmem:[%s3 + $0x208] sm:$0xff]
      %v1192 = vld [vmem:[%s3 + $0x210] sm:$0xff]
      %v1193 = vld [vmem:[%s3 + $0x218] sm:$0xff]
      %v1194 = vld [vmem:[%s3 + $0x220] sm:$0xff]
      %v1195 = vld [vmem:[%s3 + $0x228] sm:$0xff]
      %v1196 = vld [vmem:[%s3 + $0x230] sm:$0xff]
      %v1197 = vld [vmem:[%s3 + $0x238] sm:$0xff]
      %v1198 = vld [vmem:[%s3 + $0x240] sm:$0xff]
      %v1199 = vld [vmem:[%s3 + $0x248] sm:$0xff]
      %v1200 = vld [vmem:[%s3 + $0x250] sm:$0xff]
      %v1201 = vld [vmem:[%s3 + $0x258] sm:$0xff]
      %v1202 = vld [vmem:[%s3 + $0x260] sm:$0xff]
      %v1203 = vld [vmem:[%s3 + $0x268] sm:$0xff]
      %v1204 = vld [vmem:[%s3 + $0x270] sm:$0xff]
      %v1205 = vld [vmem:[%s3 + $0x278] sm:$0xff]
      %v1206 = vld [vmem:[%s3 + $0x280] sm:$0xff]
      %v1207 = vld [vmem:[%s3 + $0x288] sm:$0xff]
      %v1208 = vld [vmem:[%s3 + $0x290] sm:$0xff]
      %v1209 = vld [vmem:[%s3 + $0x298] sm:$0xff]
      %v1210 = vld [vmem:[%s3 + $0x2a0] sm:$0xff]
      %v1211 = vld [vmem:[%s3 + $0x2a8] sm:$0xff]
      %v1212 = vld [vmem:[%s3 + $0x2b0] sm:$0xff]
      %v1213 = vld [vmem:[%s3 + $0x2b8] sm:$0xff]
      %v1214 = vld [vmem:[%s3 + $0x2c0] sm:$0xff]
      %v1215 = vld [vmem:[%s3 + $0x2c8] sm:$0xff]
      %v1216 = vld [vmem:[%s3 + $0x2d0] sm:$0xff]
      %v1217 = vld [vmem:[%s3 + $0x2d8] sm:$0xff]
      %v1218 = vld [vmem:[%s3 + $0x2e0] sm:$0xff]
      %v1219 = vld [vmem:[%s3 + $0x2e8] sm:$0xff]
      %v1220 = vld [vmem:[%s3 + $0x2f0] sm:$0xff]
      %v1221 = vld [vmem:[%s3 + $0x2f8] sm:$0xff]
      %v1222 = vld [vmem:[%s3 + $0x300] sm:$0xff]
      %v1223 = vld [vmem:[%s3 + $0x308] sm:$0xff]
      %v1224 = vld [vmem:[%s3 + $0x310] sm:$0xff]
      %v1225 = vld [vmem:[%s3 + $0x318] sm:$0xff]
      %v1226 = vld [vmem:[%s3 + $0x320] sm:$0xff]
      %v1227 = vld [vmem:[%s3 + $0x328] sm:$0xff]
      %v1228 = vld [vmem:[%s3 + $0x330] sm:$0xff]
      %v1229 = vld [vmem:[%s3 + $0x338] sm:$0xff]
      %v1230 = vld [vmem:[%s3 + $0x340] sm:$0xff]
      %v1231 = vld [vmem:[%s3 + $0x348] sm:$0xff]
      %v1232 = vld [vmem:[%s3 + $0x350] sm:$0xff]
      %v1233 = vld [vmem:[%s3 + $0x358] sm:$0xff]
      %v1234 = vld [vmem:[%s3 + $0x360] sm:$0xff]
      %v1235 = vld [vmem:[%s3 + $0x368] sm:$0xff]
      %v1236 = vld [vmem:[%s3 + $0x370] sm:$0xff]
      %v1237 = vld [vmem:[%s3 + $0x378] sm:$0xff]
      %v1238 = vld [vmem:[%s3 + $0x380] sm:$0xff]
      %v1239 = vld [vmem:[%s3 + $0x388] sm:$0xff]
      %v1240 = vld [vmem:[%s3 + $0x390] sm:$0xff]
      %v1241 = vld [vmem:[%s3 + $0x398] sm:$0xff]
      %v1242 = vld [vmem:[%s3 + $0x3a0] sm:$0xff]
      %v1243 = vld [vmem:[%s3 + $0x3a8] sm:$0xff]
      %v1244 = vld [vmem:[%s3 + $0x3b0] sm:$0xff]
      %v1245 = vld [vmem:[%s3 + $0x3b8] sm:$0xff]
      %v1246 = vmul.f32 %v1006, %v1126
      %v1247 = vmul.f32 %v1007, %v1127
      %v1248 = vmul.f32 %v1008, %v1128
      %v1249 = vmul.f32 %v1009, %v1129
      %v1250 = vmul.f32 %v1010, %v1130
      %v1251 = vmul.f32 %v1011, %v1131
      %v1252 = vmul.f32 %v1012, %v1132
      %v1253 = vmul.f32 %v1013, %v1133
      %v1254 = vmul.f32 %v1014, %v1134
      %v1255 = vmul.f32 %v1015, %v1135
      %v1256 = vmul.f32 %v1016, %v1136
      %v1257 = vmul.f32 %v1017, %v1137
      %v1258 = vmul.f32 %v1018, %v1138
      %v1259 = vmul.f32 %v1019, %v1139
      %v1260 = vmul.f32 %v1020, %v1140
      %v1261 = vmul.f32 %v1021, %v1141
      %v1262 = vmul.f32 %v1022, %v1142
      %v1263 = vmul.f32 %v1023, %v1143
      %v1264 = vmul.f32 %v1024, %v1144
      %v1265 = vmul.f32 %v1025, %v1145
      %v1266 = vmul.f32 %v1026, %v1146
      %v1267 = vmul.f32 %v1027, %v1147
      %v1268 = vmul.f32 %v1028, %v1148
      %v1269 = vmul.f32 %v1029, %v1149
      %v1270 = vmul.f32 %v1030, %v1150
      %v1271 = vmul.f32 %v1031, %v1151
      %v1272 = vmul.f32 %v1032, %v1152
      %v1273 = vmul.f32 %v1033, %v1153
      %v1274 = vmul.f32 %v1034, %v1154
      %v1275 = vmul.f32 %v1035, %v1155
      %v1276 = vmul.f32 %v1036, %v1156
      %v1277 = vmul.f32 %v1037, %v1157
      %v1278 = vmul.f32 %v1038, %v1158
      %v1279 = vmul.f32 %v1039, %v1159
      %v1280 = vmul.f32 %v1040, %v1160
      %v1281 = vmul.f32 %v1041, %v1161
      %v1282 = vmul.f32 %v1042, %v1162
      %v1283 = vmul.f32 %v1043, %v1163
      %v1284 = vmul.f32 %v1044, %v1164
      %v1285 = vmul.f32 %v1045, %v1165
      %v1286 = vmul.f32 %v1046, %v1166
      %v1287 = vmul.f32 %v1047, %v1167
      %v1288 = vmul.f32 %v1048, %v1168
      %v1289 = vmul.f32 %v1049, %v1169
      %v1290 = vmul.f32 %v1050, %v1170
      %v1291 = vmul.f32 %v1051, %v1171
      %v1292 = vmul.f32 %v1052, %v1172
      %v1293 = vmul.f32 %v1053, %v1173
      %v1294 = vmul.f32 %v1054, %v1174
      %v1295 = vmul.f32 %v1055, %v1175
      %v1296 = vmul.f32 %v1056, %v1176
      %v1297 = vmul.f32 %v1057, %v1177
      %v1298 = vmul.f32 %v1058, %v1178
      %v1299 = vmul.f32 %v1059, %v1179
      %v1300 = vmul.f32 %v1060, %v1180
      %v1301 = vmul.f32 %v1061, %v1181
      %v1302 = vmul.f32 %v1062, %v1182
      %v1303 = vmul.f32 %v1063, %v1183
      %v1304 = vmul.f32 %v1064, %v1184
      %v1305 = vmul.f32 %v1065, %v1185
      %v1306 = vmul.f32 %v1066, %v1186
      %v1307 = vmul.f32 %v1067, %v1187
      %v1308 = vmul.f32 %v1068, %v1188
      %v1309 = vmul.f32 %v1069, %v1189
      %v1310 = vmul.f32 %v1070, %v1190
      %v1311 = vmul.f32 %v1071, %v1191
      %v1312 = vmul.f32 %v1072, %v1192
      %v1313 = vmul.f32 %v1073, %v1193
      %v1314 = vmul.f32 %v1074, %v1194
      %v1315 = vmul.f32 %v1075, %v1195
      %v1316 = vmul.f32 %v1076, %v1196
      %v1317 = vmul.f32 %v1077, %v1197
      %v1318 = vmul.f32 %v1078, %v1198
      %v1319 = vmul.f32 %v1079, %v1199
      %v1320 = vmul.f32 %v1080, %v1200
      %v1321 = vmul.f32 %v1081, %v1201
      %v1322 = vmul.f32 %v1082, %v1202
      %v1323 = vmul.f32 %v1083, %v1203
      %v1324 = vmul.f32 %v1084, %v1204
      %v1325 = vmul.f32 %v1085, %v1205
      %v1326 = vmul.f32 %v1086, %v1206
      %v1327 = vmul.f32 %v1087, %v1207
      %v1328 = vmul.f32 %v1088, %v1208
      %v1329 = vmul.f32 %v1089, %v1209
      %v1330 = vmul.f32 %v1090, %v1210
      %v1331 = vmul.f32 %v1091, %v1211
      %v1332 = vmul.f32 %v1092, %v1212
      %v1333 = vmul.f32 %v1093, %v1213
      %v1334 = vmul.f32 %v1094, %v1214
      %v1335 = vmul.f32 %v1095, %v1215
      %v1336 = vmul.f32 %v1096, %v1216
      %v1337 = vmul.f32 %v1097, %v1217
      %v1338 = vmul.f32 %v1098, %v1218
      %v1339 = vmul.f32 %v1099, %v1219
      %v1340 = vmul.f32 %v1100, %v1220
      %v1341 = vmul.f32 %v1101, %v1221
      %v1342 = vmul.f32 %v1102, %v1222
      %v1343 = vmul.f32 %v1103, %v1223
      %v1344 = vmul.f32 %v1104, %v1224
      %v1345 = vmul.f32 %v1105, %v1225
      %v1346 = vmul.f32 %v1106, %v1226
      %v1347 = vmul.f32 %v1107, %v1227
      %v1348 = vmul.f32 %v1108, %v1228
      %v1349 = vmul.f32 %v1109, %v1229
      %v1350 = vmul.f32 %v1110, %v1230
      %v1351 = vmul.f32 %v1111, %v1231
      %v1352 = vmul.f32 %v1112, %v1232
      %v1353 = vmul.f32 %v1113, %v1233
      %v1354 = vmul.f32 %v1114, %v1234
      %v1355 = vmul.f32 %v1115, %v1235
      %v1356 = vmul.f32 %v1116, %v1236
      %v1357 = vmul.f32 %v1117, %v1237
      %v1358 = vmul.f32 %v1118, %v1238
      %v1359 = vmul.f32 %v1119, %v1239
      %v1360 = vmul.f32 %v1120, %v1240
      %v1361 = vmul.f32 %v1121, %v1241
      %v1362 = vmul.f32 %v1122, %v1242
      %v1363 = vmul.f32 %v1123, %v1243
      %v1364 = vmul.f32 %v1124, %v1244
      %v1365 = vmul.f32 %v1125, %v1245
      %v1366 = vld [vmem:[%s4] sm:$0xff]
      %v1368 = vcombine.high %v1366, %v1366
      %v1370 = vunpack.c.l.s4 1983009808
      %v1371 = vunpack.c.0.s8 %v1370
      %v1372 = vlaneseq
      %v1373 = vshrl.u32 %v1372, 7
      %v1374 = vsub.s32 %v1371, %v1373
      %v1375 = vrot.slane %v1366, %v1374
      %v1377 = vunpack.c.l.s4 1983009808
      %v1378 = vunpack.c.0.s8 %v1377
      %v1379 = vlaneseq
      %v1380 = vshrl.u32 %v1379, 7
      %v1381 = vsub.s32 %v1378, %v1380
      %v1382 = vrot.slane %v1368, %v1381
      %v1383 = vcombine.high %v1375, %v1375
      %v1384 = vcombine.high %v1382, %v1382
      %vm1388 = vcmask 785408
      %v1389 = vsel %vm1388, %v1384, 0
      %1391 = vmatprep.subr.mxu0 %v1277
      %1392 = vmatpush1.msra.mxu0 %v1276
      %1393 = vmatprep.subr.mxu0 %v1275
      %1394 = vmatpush1.msra.mxu0 %v1274
      %1395 = vmatprep.subr.mxu0 %v1273
      %1396 = vmatpush1.msra.mxu0 %v1272
      %1397 = vmatprep.subr.mxu0 %v1271
      %1398 = vmatpush1.msra.mxu0 %v1270
      %1399 = vmatprep.subr.mxu0 %v1269
      %1400 = vmatpush1.msra.mxu0 %v1268
      %1401 = vmatprep.subr.mxu0 %v1267
      %1402 = vmatpush1.msra.mxu0 %v1266
      %1403 = vmatprep.subr.mxu0 %v1265
      %1404 = vmatpush1.msra.mxu0 %v1264
      %1405 = vmatprep.subr.mxu0 %v1263
      %1406 = vmatpush1.msra.mxu0 %v1262
      %1407 = vmatprep.subr.mxu0 %v1261
      %1408 = vmatpush1.msra.mxu0 %v1260
      %1409 = vmatprep.subr.mxu0 %v1259
      %1410 = vmatpush1.msra.mxu0 %v1258
      %1411 = vmatprep.subr.mxu0 %v1257
      %1412 = vmatpush1.msra.mxu0 %v1256
      %1413 = vmatprep.subr.mxu0 %v1255
      %1414 = vmatpush1.msra.mxu0 %v1254
      %1415 = vmatprep.subr.mxu0 %v1253
      %1416 = vmatpush1.msra.mxu0 %v1252
      %1417 = vmatprep.subr.mxu0 %v1251
      %1418 = vmatpush1.msra.mxu0 %v1250
      %1419 = vmatprep.subr.mxu0 %v1249
      %1420 = vmatpush1.msra.mxu0 %v1248
      %1421 = vmatprep.subr.mxu0 %v1247
      %1422 = vmatpush1.msra.mxu0 %v1246
      %1423 = vmatprep.subr.mxu0 %v1309
      %1424 = vmatpush2.msra.mxu0 %v1308
      %1425 = vmatprep.subr.mxu0 %v1307
      %1426 = vmatpush2.msra.mxu0 %v1306
      %1427 = vmatprep.subr.mxu0 %v1305
      %1428 = vmatpush2.msra.mxu0 %v1304
      %1429 = vmatprep.subr.mxu0 %v1303
      %1430 = vmatpush2.msra.mxu0 %v1302
      %1431 = vmatprep.subr.mxu0 %v1301
      %1432 = vmatpush2.msra.mxu0 %v1300
      %1433 = vmatprep.subr.mxu0 %v1299
      %1434 = vmatpush2.msra.mxu0 %v1298
      %1435 = vmatprep.subr.mxu0 %v1297
      %1436 = vmatpush2.msra.mxu0 %v1296
      %1437 = vmatprep.subr.mxu0 %v1295
      %1438 = vmatpush2.msra.mxu0 %v1294
      %1439 = vmatprep.subr.mxu0 %v1293
      %1440 = vmatpush2.msra.mxu0 %v1292
      %1441 = vmatprep.subr.mxu0 %v1291
      %1442 = vmatpush2.msra.mxu0 %v1290
      %1443 = vmatprep.subr.mxu0 %v1289
      %1444 = vmatpush2.msra.mxu0 %v1288
      %1445 = vmatprep.subr.mxu0 %v1287
      %1446 = vmatpush2.msra.mxu0 %v1286
      %1447 = vmatprep.subr.mxu0 %v1285
      %1448 = vmatpush2.msra.mxu0 %v1284
      %1449 = vmatprep.subr.mxu0 %v1283
      %1450 = vmatpush2.msra.mxu0 %v1282
      %1451 = vmatprep.subr.mxu0 %v1281
      %1452 = vmatpush2.msra.mxu0 %v1280
      %1453 = vmatprep.subr.mxu0 %v1279
      %1454 = vmatpush2.msra.mxu0 %v1278
      %1455 = vmatprep.mubr.f32.mxu0 %v1383
      %1456 = vmatmul.mubr.f32.gmra.mxu0 %v1375
      %v1457 = vpop.f32.mrf.mxu0
      %v1458 = vadd.f32 0.0, %v1457
      %v1459 = vpop.f32.mrf.mxu0
      %v1460 = vadd.f32 0.0, %v1459
      %1461 = vdwg.mxu0
      %1462 = vmatprep.subr.mxu0 %v1341
      %1463 = vmatpush1.msra.mxu0 %v1340
      %1464 = vmatprep.subr.mxu0 %v1339
      %1465 = vmatpush1.msra.mxu0 %v1338
      %1466 = vmatprep.subr.mxu0 %v1337
      %1467 = vmatpush1.msra.mxu0 %v1336
      %1468 = vmatprep.subr.mxu0 %v1335
      %1469 = vmatpush1.msra.mxu0 %v1334
      %1470 = vmatprep.subr.mxu0 %v1333
      %1471 = vmatpush1.msra.mxu0 %v1332
      %1472 = vmatprep.subr.mxu0 %v1331
      %1473 = vmatpush1.msra.mxu0 %v1330
      %1474 = vmatprep.subr.mxu0 %v1329
      %1475 = vmatpush1.msra.mxu0 %v1328
      %1476 = vmatprep.subr.mxu0 %v1327
      %1477 = vmatpush1.msra.mxu0 %v1326
      %1478 = vmatprep.subr.mxu0 %v1325
      %1479 = vmatpush1.msra.mxu0 %v1324
      %1480 = vmatprep.subr.mxu0 %v1323
      %1481 = vmatpush1.msra.mxu0 %v1322
      %1482 = vmatprep.subr.mxu0 %v1321
      %1483 = vmatpush1.msra.mxu0 %v1320
      %1484 = vmatprep.subr.mxu0 %v1319
      %1485 = vmatpush1.msra.mxu0 %v1318
      %1486 = vmatprep.subr.mxu0 %v1317
      %1487 = vmatpush1.msra.mxu0 %v1316
      %1488 = vmatprep.subr.mxu0 %v1315
      %1489 = vmatpush1.msra.mxu0 %v1314
      %1490 = vmatprep.subr.mxu0 %v1313
      %1491 = vmatpush1.msra.mxu0 %v1312
      %1492 = vmatprep.subr.mxu0 %v1311
      %1493 = vmatpush1.msra.mxu0 %v1310
      %1494 = vmatprep.subr.mxu0 0.0
      %1495 = vmatpush2.msra.mxu0 0.0
      %1496 = vmatprep.subr.mxu0 0.0
      %1497 = vmatpush2.msra.mxu0 0.0
      %1498 = vmatprep.subr.mxu0 0.0
      %1499 = vmatpush2.msra.mxu0 0.0
      %1500 = vmatprep.subr.mxu0 0.0
      %1501 = vmatpush2.msra.mxu0 0.0
      %1502 = vmatprep.subr.mxu0 %v1365
      %1503 = vmatpush2.msra.mxu0 %v1364
      %1504 = vmatprep.subr.mxu0 %v1363
      %1505 = vmatpush2.msra.mxu0 %v1362
      %1506 = vmatprep.subr.mxu0 %v1361
      %1507 = vmatpush2.msra.mxu0 %v1360
      %1508 = vmatprep.subr.mxu0 %v1359
      %1509 = vmatpush2.msra.mxu0 %v1358
      %1510 = vmatprep.subr.mxu0 %v1357
      %1511 = vmatpush2.msra.mxu0 %v1356
      %1512 = vmatprep.subr.mxu0 %v1355
      %1513 = vmatpush2.msra.mxu0 %v1354
      %1514 = vmatprep.subr.mxu0 %v1353
      %1515 = vmatpush2.msra.mxu0 %v1352
      %1516 = vmatprep.subr.mxu0 %v1351
      %1517 = vmatpush2.msra.mxu0 %v1350
      %1518 = vmatprep.subr.mxu0 %v1349
      %1519 = vmatpush2.msra.mxu0 %v1348
      %1520 = vmatprep.subr.mxu0 %v1347
      %1521 = vmatpush2.msra.mxu0 %v1346
      %1522 = vmatprep.subr.mxu0 %v1345
      %1523 = vmatpush2.msra.mxu0 %v1344
      %1524 = vmatprep.subr.mxu0 %v1343
      %1525 = vmatpush2.msra.mxu0 %v1342
      %1526 = vmatprep.mubr.f32.mxu0 %v1389
      %1527 = vmatmul.mubr.f32.gmra.mxu0 %v1382
      %v1528 = vpop.f32.mrf.mxu0
      %v1529 = vadd.f32 %v1458, %v1528
      %v1530 = vpop.f32.mrf.mxu0
      %v1531 = vadd.f32 %v1460, %v1530
      %1532 = vdwg.mxu0
      %v1533 = vld [vmem:[%s5] sm:$0xff]
      %v1534 = vld [vmem:[%s5 + $0x8] sm:$0xff]
      %v1535 = vld [vmem:[%s5 + $0x10] sm:$0xff]
      %v1536 = vld [vmem:[%s5 + $0x18] sm:$0xff]
      %v1537 = vld [vmem:[%s5 + $0x20] sm:$0xff]
      %v1538 = vld [vmem:[%s5 + $0x28] sm:$0xff]
      %v1539 = vld [vmem:[%s5 + $0x30] sm:$0xff]
      %v1540 = vld [vmem:[%s5 + $0x38] sm:$0xff]
      %v1541 = vld [vmem:[%s5 + $0x40] sm:$0xff]
      %v1542 = vld [vmem:[%s5 + $0x48] sm:$0xff]
      %v1543 = vld [vmem:[%s5 + $0x50] sm:$0xff]
      %v1544 = vld [vmem:[%s5 + $0x58] sm:$0xff]
      %v1545 = vld [vmem:[%s5 + $0x60] sm:$0xff]
      %v1546 = vld [vmem:[%s5 + $0x68] sm:$0xff]
      %v1547 = vld [vmem:[%s5 + $0x70] sm:$0xff]
      %v1548 = vld [vmem:[%s5 + $0x78] sm:$0xff]
      %v1549 = vld [vmem:[%s5 + $0x80] sm:$0xff]
      %v1550 = vld [vmem:[%s5 + $0x88] sm:$0xff]
      %v1551 = vld [vmem:[%s5 + $0x90] sm:$0xff]
      %v1552 = vld [vmem:[%s5 + $0x98] sm:$0xff]
      %v1553 = vld [vmem:[%s5 + $0xa0] sm:$0xff]
      %v1554 = vld [vmem:[%s5 + $0xa8] sm:$0xff]
      %v1555 = vld [vmem:[%s5 + $0xb0] sm:$0xff]
      %v1556 = vld [vmem:[%s5 + $0xb8] sm:$0xff]
      %v1557 = vld [vmem:[%s5 + $0xc0] sm:$0xff]
      %v1558 = vld [vmem:[%s5 + $0xc8] sm:$0xff]
      %v1559 = vld [vmem:[%s5 + $0xd0] sm:$0xff]
      %v1560 = vld [vmem:[%s5 + $0xd8] sm:$0xff]
      %v1561 = vld [vmem:[%s5 + $0xe0] sm:$0xff]
      %v1562 = vld [vmem:[%s5 + $0xe8] sm:$0xff]
      %v1563 = vunpack.c.l.bf16 %v1533
      %v1564 = vunpack.c.h.bf16 %v1533
      %v1565 = vunpack.c.l.bf16 %v1534
      %v1566 = vunpack.c.h.bf16 %v1534
      %v1567 = vunpack.c.l.bf16 %v1535
      %v1568 = vunpack.c.h.bf16 %v1535
      %v1569 = vunpack.c.l.bf16 %v1536
      %v1570 = vunpack.c.h.bf16 %v1536
      %v1571 = vunpack.c.l.bf16 %v1537
      %v1572 = vunpack.c.h.bf16 %v1537
      %v1573 = vunpack.c.l.bf16 %v1538
      %v1574 = vunpack.c.h.bf16 %v1538
      %v1575 = vunpack.c.l.bf16 %v1539
      %v1576 = vunpack.c.h.bf16 %v1539
      %v1577 = vunpack.c.l.bf16 %v1540
      %v1578 = vunpack.c.h.bf16 %v1540
      %v1579 = vunpack.c.l.bf16 %v1541
      %v1580 = vunpack.c.h.bf16 %v1541
      %v1581 = vunpack.c.l.bf16 %v1542
      %v1582 = vunpack.c.h.bf16 %v1542
      %v1583 = vunpack.c.l.bf16 %v1543
      %v1584 = vunpack.c.h.bf16 %v1543
      %v1585 = vunpack.c.l.bf16 %v1544
      %v1586 = vunpack.c.h.bf16 %v1544
      %v1587 = vunpack.c.l.bf16 %v1545
      %v1588 = vunpack.c.h.bf16 %v1545
      %v1589 = vunpack.c.l.bf16 %v1546
      %v1590 = vunpack.c.h.bf16 %v1546
      %v1591 = vunpack.c.l.bf16 %v1547
      %v1592 = vunpack.c.h.bf16 %v1547
      %v1593 = vunpack.c.l.bf16 %v1548
      %v1594 = vunpack.c.h.bf16 %v1548
      %v1595 = vunpack.c.l.bf16 %v1549
      %v1596 = vunpack.c.h.bf16 %v1549
      %v1597 = vunpack.c.l.bf16 %v1550
      %v1598 = vunpack.c.h.bf16 %v1550
      %v1599 = vunpack.c.l.bf16 %v1551
      %v1600 = vunpack.c.h.bf16 %v1551
      %v1601 = vunpack.c.l.bf16 %v1552
      %v1602 = vunpack.c.h.bf16 %v1552
      %v1603 = vunpack.c.l.bf16 %v1553
      %v1604 = vunpack.c.h.bf16 %v1553
      %v1605 = vunpack.c.l.bf16 %v1554
      %v1606 = vunpack.c.h.bf16 %v1554
      %v1607 = vunpack.c.l.bf16 %v1555
      %v1608 = vunpack.c.h.bf16 %v1555
      %v1609 = vunpack.c.l.bf16 %v1556
      %v1610 = vunpack.c.h.bf16 %v1556
      %v1611 = vunpack.c.l.bf16 %v1557
      %v1612 = vunpack.c.h.bf16 %v1557
      %v1613 = vunpack.c.l.bf16 %v1558
      %v1614 = vunpack.c.h.bf16 %v1558
      %v1615 = vunpack.c.l.bf16 %v1559
      %v1616 = vunpack.c.h.bf16 %v1559
      %v1617 = vunpack.c.l.bf16 %v1560
      %v1618 = vunpack.c.h.bf16 %v1560
      %v1619 = vunpack.c.l.bf16 %v1561
      %v1620 = vunpack.c.h.bf16 %v1561
      %v1621 = vunpack.c.l.bf16 %v1562
      %v1622 = vunpack.c.h.bf16 %v1562
      %v1623 = vld [vmem:[%s6] sm:$0x3]
      %v1625 = vlaneseq
      %v1626 = vshrl.u32 %v1625, 7
      %v1627 = vsub.s32 0, %v1626
      %v1628 = vrot.slane %v1623, %v1627
      %v1629 = vlaneseq
      %v1630 = vshrl.u32 %v1629, 7
      %v1631 = vsub.s32 1, %v1630
      %v1632 = vrot.slane %v1623, %v1631
      %vm1635 = vcmask 916480
      %v1637 = vsel %vm1635, %v1531, 0
      %1639 = vmatprep.subr.mxu0 %v1594
      %1640 = vmatpush1.msra.mxu0 %v1593
      %1641 = vmatprep.subr.mxu0 %v1592
      %1642 = vmatpush1.msra.mxu0 %v1591
      %1643 = vmatprep.subr.mxu0 %v1590
      %1644 = vmatpush1.msra.mxu0 %v1589
      %1645 = vmatprep.subr.mxu0 %v1588
      %1646 = vmatpush1.msra.mxu0 %v1587
      %1647 = vmatprep.subr.mxu0 %v1586
      %1648 = vmatpush1.msra.mxu0 %v1585
      %1649 = vmatprep.subr.mxu0 %v1584
      %1650 = vmatpush1.msra.mxu0 %v1583
      %1651 = vmatprep.subr.mxu0 %v1582
      %1652 = vmatpush1.msra.mxu0 %v1581
      %1653 = vmatprep.subr.mxu0 %v1580
      %1654 = vmatpush1.msra.mxu0 %v1579
      %1655 = vmatprep.subr.mxu0 %v1578
      %1656 = vmatpush1.msra.mxu0 %v1577
      %1657 = vmatprep.subr.mxu0 %v1576
      %1658 = vmatpush1.msra.mxu0 %v1575
      %1659 = vmatprep.subr.mxu0 %v1574
      %1660 = vmatpush1.msra.mxu0 %v1573
      %1661 = vmatprep.subr.mxu0 %v1572
      %1662 = vmatpush1.msra.mxu0 %v1571
      %1663 = vmatprep.subr.mxu0 %v1570
      %1664 = vmatpush1.msra.mxu0 %v1569
      %1665 = vmatprep.subr.mxu0 %v1568
      %1666 = vmatpush1.msra.mxu0 %v1567
      %1667 = vmatprep.subr.mxu0 %v1566
      %1668 = vmatpush1.msra.mxu0 %v1565
      %1669 = vmatprep.subr.mxu0 %v1564
      %1670 = vmatpush1.msra.mxu0 %v1563
      %1671 = vmatprep.subr.mxu0 0.0
      %1672 = vmatpush2.msra.mxu0 0.0
      %1673 = vmatprep.subr.mxu0 0.0
      %1674 = vmatpush2.msra.mxu0 0.0
      %1675 = vmatprep.subr.mxu0 %v1622
      %1676 = vmatpush2.msra.mxu0 %v1621
      %1677 = vmatprep.subr.mxu0 %v1620
      %1678 = vmatpush2.msra.mxu0 %v1619
      %1679 = vmatprep.subr.mxu0 %v1618
      %1680 = vmatpush2.msra.mxu0 %v1617
      %1681 = vmatprep.subr.mxu0 %v1616
      %1682 = vmatpush2.msra.mxu0 %v1615
      %1683 = vmatprep.subr.mxu0 %v1614
      %1684 = vmatpush2.msra.mxu0 %v1613
      %1685 = vmatprep.subr.mxu0 %v1612
      %1686 = vmatpush2.msra.mxu0 %v1611
      %1687 = vmatprep.subr.mxu0 %v1610
      %1688 = vmatpush2.msra.mxu0 %v1609
      %1689 = vmatprep.subr.mxu0 %v1608
      %1690 = vmatpush2.msra.mxu0 %v1607
      %1691 = vmatprep.subr.mxu0 %v1606
      %1692 = vmatpush2.msra.mxu0 %v1605
      %1693 = vmatprep.subr.mxu0 %v1604
      %1694 = vmatpush2.msra.mxu0 %v1603
      %1695 = vmatprep.subr.mxu0 %v1602
      %1696 = vmatpush2.msra.mxu0 %v1601
      %1697 = vmatprep.subr.mxu0 %v1600
      %1698 = vmatpush2.msra.mxu0 %v1599
      %1699 = vmatprep.subr.mxu0 %v1598
      %1700 = vmatpush2.msra.mxu0 %v1597
      %1701 = vmatprep.subr.mxu0 %v1596
      %1702 = vmatpush2.msra.mxu0 %v1595
      %1703 = vmatprep.mubr.f32.mxu0 %v1637
      %1704 = vmatmul.mubr.f32.gmra.mxu0 %v1529
      %v1705 = vpop.f32.mrf.mxu0
      %v1706 = vadd.f32 %v1628, %v1705
      %v1707 = vpop.f32.mrf.mxu0
      %v1708 = vadd.f32 %v1632, %v1707
      %1709 = vdwg.mxu0
      %v1710 = vmax.f32 %v1706, 0.0
      %v1711 = vmax.f32 %v1708, 0.0
      %v1712 = vld [vmem:[%s7] sm:$0x3]
      %v1714 = vlaneseq
      %v1715 = vshrl.u32 %v1714, 7
      %v1716 = vsub.s32 0, %v1715
      %v1717 = vrot.slane %v1712, %v1716
      %v1718 = vlaneseq
      %v1719 = vshrl.u32 %v1718, 7
      %v1720 = vsub.s32 1, %v1719
      %v1721 = vrot.slane %v1712, %v1720
      %v1724 = vmul.f32 %v1710, %v1717
      %v1725 = vmul.f32 %v1711, %v1721
      %v1726 = vld [vmem:[%s8] sm:$0x3]
      %v1728 = vlaneseq
      %v1729 = vshrl.u32 %v1728, 7
      %v1730 = vsub.s32 0, %v1729
      %v1731 = vrot.slane %v1726, %v1730
      %v1732 = vlaneseq
      %v1733 = vshrl.u32 %v1732, 7
      %v1734 = vsub.s32 1, %v1733
      %v1735 = vrot.slane %v1726, %v1734
      %v1738 = vadd.f32 %v1724, %v1731
      %v1739 = vadd.f32 %v1725, %v1735
      %v1742 = vcombine.low %v1738, %v1739
      %v1744 = vunpack.c.l.s4 1983009808
      %v1745 = vunpack.c.0.s8 %v1744
      %v1746 = vlaneseq
      %v1747 = vshrl.u32 %v1746, 7
      %v1748 = vsub.s32 %v1745, %v1747
      %v1749 = vrot.slane %v1742, %v1748
      %1751 = vst [vmem:[%s334] sm:$0xf] %v1749
      %p1752 = scmp.lt.s32.totalorder %s20, 1
      %s1753 = scalar_select %p1752, %s20, 1
      %s1754 = smul.addr %s1753, 2
      %s1755 = smul.addr %s1754, 2
      %s1756 = scalar_lea.vmem %s9, %s1755
      // Predicated region
      $region57: #{forward.1} parent=55 // pred_check
        %p1757 = pneg %p232
      $region58: #{forward.1} parent=55 // pred_check_branch
        %1759 = sbr.rel (%p1757) target = $region60
      $region59: #{forward.1} parent=55 // pred_region
        _
      $region60: #{forward.1} parent=55 // pred_fallthru
        _
    $region56: #{forward.1} parent=5 // pred_fallthru
      _
    %p1760 = scmp.le.s32.totalorder 2, %s15
    // Predicated region
    $region61: #{forward.1} parent=5 // pred_check
      %p1761 = pneg %p1760
    $region62: #{forward.1} parent=5 // pred_check_branch
      %1763 = sbr.rel (%p1761) target = $region64
    $region63: #{forward.1} parent=5 // pred_region
      %s1764 = ssub.s32 %s15, 2
      // Predicated region
      $region65: #{forward.1} parent=63 // pred_check
        %p1765 = pneg %p238
      $region66: #{forward.1} parent=63 // pred_check_branch
        %1767 = sbr.rel (%p1765) target = $region68
      $region67: #{forward.1} parent=63 // pred_region
        %p1768 = scmp.lt.s32.totalorder %s21, 1
        %s1769 = scalar_select %p1768, %s21, 1
        %s1770 = smul.addr %s1769, 2
        %s1771 = smul.addr %s1770, 2
        %s1772 = scalar_lea.vmem %s9, %s1771
      $region68: #{forward.1} parent=63 // pred_fallthru
        _
    $region64: #{forward.1} parent=5 // pred_fallthru
      _
  $region6: #{forward.1} parent=0 // loop_footer
    %s19 = sadd.s32 1, %s15
  $region7: #{forward.1} parent=0 // loop_footer_branch
    %14 = sbr.rel target = $region3
  $region8: #{forward.1} parent=0 // loop_exit
    _

</llo_original>
